<compile_context>
chip_gen: v7x
topology: tpu7x:2x2x1
jax: 0.10.0
libtpu: 0.0.40
codegen_flags: <defaults>
</compile_context>

<pallas_src>
import functools

import jax
import jax.numpy as jnp
from jax import lax
from jax.experimental import pallas as pl
from jax.experimental.pallas import tpu as pltpu

_NEG_BIG = -1e30


def _round_up(x, m):
    return (x + m - 1) // m * m


def _vmem_budget_bytes():
    """Scoped VMEM budget with ~25% headroom: ~48 MiB v7x, ~96 MiB v5e/v6e."""
    cap = 64 * 1024 * 1024
    try:
        info = pltpu.get_tpu_info()
        cap = getattr(info, "vmem_capacity_bytes", cap) or cap
    except Exception:
        pass
    return int(min(96 * 1024 * 1024, (cap * 3) // 4))


def _largest_tile(n_pad, target):
    """Largest multiple of 256 that divides n_pad and is <= target (>= 256)."""
    best = 256
    t = 256
    while t <= min(target, n_pad):
        if n_pad % t == 0:
            best = t
        t += 256
    return best


def _pick_tiles(n_pad, f_max, vmem_budget, tm_target, tk_target):
    """Choose (tm, tk, x_resident) fitting the VMEM budget."""
    # Keep X (K-side features) VMEM-resident when the (conservatively
    # double-buffered) slab is small; kills the X re-stream over row blocks.
    x_resident = 2 * n_pad * f_max * 2 <= 16 * 1024 * 1024

    # Keep >= 2 row blocks when possible so the "parallel" row axis can split
    # across v7x's two TensorCores.
    tm_cap = tm_target if n_pad < 512 else min(tm_target, n_pad // 2)
    tm = _largest_tile(n_pad, tm_cap)
    tk = _largest_tile(n_pad, tk_target)

    def est(tm_, tk_, x_res):
        a = 2 * tm_ * tk_                                   # int8 A, 2 buffers
        xk = 2 * (n_pad if x_res else tk_) * f_max * 2      # bf16 X (K side)
        xs = 2 * tm_ * f_max * 2                            # bf16 X (self)
        acc = tm_ * f_max * 4                               # f32 accumulator
        out = 2 * tm_ * f_max * 4                           # output buffers
        w = 2 * (2 * f_max * f_max * 2) + 2 * f_max * 4     # Wl, Wr, bias
        return a + xk + xs + acc + out + w

    while est(tm, tk, x_resident) > vmem_budget:
        if tk > max(tm, 256):
            tk = _largest_tile(n_pad, tk // 2)
        elif tm > 256:
            tm = _largest_tile(n_pad, tm // 2)
        elif x_resident:
            x_resident = False
        else:
            break
    return tm, tk, x_resident


def sage_layer_kernel(a_ref, xk_ref, xs_ref, wl_ref, wr_ref, b_ref, o_ref,
                      acc_ref, *, tk, x_resident, apply_relu,
                      apply_logsoftmax, n_valid_out):
    k = pl.program_id(1)

    @pl.when(k == 0)
    def _():
        acc_ref[...] = jnp.zeros_like(acc_ref)

    if x_resident:
        # X lives fully in VMEM (constant block index); slice the K window.
        start = pl.multiple_of(k * tk, tk)
        xk = xk_ref[pl.ds(start, tk), :]
    else:
        xk = xk_ref[...]

    # Sum-aggregation over the src (K) axis: acc[dst,:] += A[dst,src] @ X[src,:]
    # int8 A upcast to bf16 in-register (free while HBM-bound), f32 accumulate.
    a = a_ref[...].astype(jnp.bfloat16)
    acc_ref[...] += jnp.dot(a, xk, preferred_element_type=jnp.float32)

    @pl.when(k == pl.num_programs(1) - 1)
    def _():
        agg = acc_ref[...]                              # (TM, Fi_pad) f32

        # lin_l(agg) + bias + lin_r(x): bf16 MXU inputs, f32 accumulation.
        out = jnp.dot(agg.astype(jnp.bfloat16), wl_ref[...],
                      preferred_element_type=jnp.float32)
        out = out + b_ref[...]
        out = out + jnp.dot(xs_ref[...], wr_ref[...],
                            preferred_element_type=jnp.float32)

        # normalize=True -> F.normalize(out, p=2, dim=-1), eps=1e-12.
        # Padded lanes are exactly zero, so the sum over all lanes is correct.
        sumsq = jnp.sum(out * out, axis=-1, keepdims=True)
        out = out * lax.rsqrt(jnp.maximum(sumsq, 1e-24))

        if apply_relu:
            out = jnp.maximum(out, 0.0)
            # TODO(synk): dropout(p=0.5) is identity in eval; training dropout
            # would use pltpu.prng_seed + pltpu.prng_random_bits here.

        if apply_logsoftmax:
            lane = lax.broadcasted_iota(jnp.int32, out.shape, 1)
            out = jnp.where(lane < n_valid_out, out, _NEG_BIG)
            m = jnp.max(out, axis=-1, keepdims=True)
            s = out - m
            lse = jnp.log(jnp.sum(jnp.exp(s), axis=-1, keepdims=True))
            out = s - lse

        o_ref[...] = out.astype(o_ref.dtype)


def sage_layer(A_i8, X, Wl, Wr, b, *, tm, tk, x_resident, n_valid_out,
               apply_relu, apply_logsoftmax, out_dtype, vmem_limit_bytes):
    """One SAGEConv(aggr='sum', normalize=True) layer on padded inputs.

    A_i8 : (Np, Np)  int8 dense adjacency, A[dst, src] = multiplicity (<=127).
    X    : (Np, Fi)  bf16 node features, Fi padded to a multiple of 128.
    Wl, Wr : (Fi, Fo) bf16 padded weights; b : (1, Fo) f32 padded bias.
    """
    Np = A_i8.shape[0]
    Fi = X.shape[1]
    Fo = Wl.shape[1]
    assert Np % tm == 0 and Np % tk == 0
    grid = (Np // tm, Np // tk)

    kernel = functools.partial(sage_layer_kernel,
                               tk=tk, x_resident=x_resident,
                               apply_relu=apply_relu,
                               apply_logsoftmax=apply_logsoftmax,
                               n_valid_out=n_valid_out)

    if x_resident:
        xk_spec = pl.BlockSpec((Np, Fi), lambda i, k: (0, 0))   # DMA'd once
    else:
        xk_spec = pl.BlockSpec((tk, Fi), lambda i, k: (k, 0))   # re-streamed

    x_bytes = X.size * X.dtype.itemsize
    xk_traffic = x_bytes if x_resident else (Np // tm) * x_bytes
    out_bytes = Np * Fo * jnp.dtype(out_dtype).itemsize
    cost = pl.CostEstimate(
        flops=2 * Np * Np * Fi + 4 * Np * Fi * Fo,
        transcendentals=int(Np * (Fo if apply_logsoftmax else 1)),
        bytes_accessed=int(A_i8.size                      # int8 adjacency
                           + xk_traffic + x_bytes         # X (K side + self)
                           + Wl.size * 2 + Wr.size * 2 + b.size * 4
                           + out_bytes),
    )

    return pl.pallas_call(
        kernel,
        out_shape=jax.ShapeDtypeStruct((Np, Fo), out_dtype),
        grid_spec=pltpu.PrefetchScalarGridSpec(
            num_scalar_prefetch=0,
            grid=grid,
            in_specs=[
                pl.BlockSpec((tm, tk), lambda i, k: (i, k)),   # A tile (int8)
                xk_spec,                                       # X src rows (K)
                pl.BlockSpec((tm, Fi), lambda i, k: (i, 0)),   # X dst rows
                pl.BlockSpec((Fi, Fo), lambda i, k: (0, 0)),   # Wl
                pl.BlockSpec((Fi, Fo), lambda i, k: (0, 0)),   # Wr
                pl.BlockSpec((1, Fo), lambda i, k: (0, 0)),    # bias
            ],
            out_specs=pl.BlockSpec((tm, Fo), lambda i, k: (i, 0)),
            scratch_shapes=[pltpu.VMEM((tm, Fi), jnp.float32)],
        ),
        compiler_params=pltpu.CompilerParams(
            dimension_semantics=("parallel", "arbitrary"),
            vmem_limit_bytes=vmem_limit_bytes,
        ),
        cost_estimate=cost,
    )(A_i8, X, X, Wl, Wr, b)


def gcn2_forward(x, A, params, *, tm=1024, tk=2048):
    """GCN2 forward. x: (N, Fin) f32, A: (N, N) f32 dense adjacency,
    params: list of (Wl, Wr, b) per SAGEConv layer."""
    N, f_in = x.shape
    n_layers = len(params)
    n_classes = params[-1][0].shape[1]

    # Pad N only to a multiple of 256 (not a power-of-two tile) and pick tile
    # sizes (multiples of 256) that divide n_pad and fit the VMEM budget.
    n_pad = max(256, _round_up(N, 256))
    f_pads = [_round_up(f, 128) for f in
              [f_in] + [Wl.shape[1] for (Wl, _, _) in params]]
    f_max = max(f_pads)

    vmem_budget = _vmem_budget_bytes()
    tm_eff, tk_eff, x_resident = _pick_tiles(n_pad, f_max, vmem_budget, tm, tk)

    # int8 adjacency: exact for edge multiplicities <= 127 (true for simple /
    # low-multiplicity graphs); padded rows/cols are zero.
    A_p = jnp.zeros((n_pad, n_pad), jnp.int8).at[:N, :N].set(
        jnp.rint(A).astype(jnp.int8))

    f_in_pad = f_pads[0]
    h = jnp.zeros((n_pad, f_in_pad), jnp.bfloat16).at[:N, :f_in].set(
        x.astype(jnp.bfloat16))

    # TODO(synk): for small graphs the 3 layers could be fused into a single
    # pallas_call keeping h resident in VMEM; kept separate (tiled) so the
    # kernel scales to graphs whose hidden state does not fit on-chip.
    for i, (Wl, Wr, b) in enumerate(params):
        fi, fo = Wl.shape
        fi_pad, fo_pad = _round_up(fi, 128), _round_up(fo, 128)
        Wl_p = jnp.zeros((fi_pad, fo_pad), jnp.bfloat16).at[:fi, :fo].set(
            Wl.astype(jnp.bfloat16))
        Wr_p = jnp.zeros((fi_pad, fo_pad), jnp.bfloat16).at[:fi, :fo].set(
            Wr.astype(jnp.bfloat16))
        b_p = jnp.zeros((1, fo_pad), jnp.float32).at[:, :fo].set(
            b.reshape(1, -1))
        last = i == n_layers - 1
        h = sage_layer(
            A_p, h, Wl_p, Wr_p, b_p,
            tm=tm_eff, tk=tk_eff, x_resident=x_resident,
            n_valid_out=fo,
            apply_relu=not last,
            apply_logsoftmax=last,
            out_dtype=jnp.float32 if last else jnp.bfloat16,
            vmem_limit_bytes=vmem_budget,
        )

    return h[:N, :n_classes]


def init_linear(key, fan_in, fan_out, with_bias=True):
    """Deterministic Glorot-uniform weight (stored transposed: (fan_in, fan_out))."""
    kw, kb = jax.random.split(key)
    limit = (6.0 / (fan_in + fan_out)) ** 0.5
    W = jax.random.uniform(kw, (fan_in, fan_out), jnp.float32, -limit, limit)
    if with_bias:
        b = jax.random.uniform(kb, (1, fan_out), jnp.float32, -limit, limit)
    else:
        b = jnp.zeros((1, fan_out), jnp.float32)
    return W, b


if __name__ == "__main__":
    key = jax.random.PRNGKey(0)

    # Small synthetic graph: N nodes, in=4, hidden=32, out=4 classes.
    N = 16
    in_channels, hidden_channels, out_channels = 4, 32, 4

    k_x, k_e, k1, k2, k3 = jax.random.split(key, 5)

    # Node features (N, in_channels)
    x = jax.random.normal(k_x, (N, in_channels), jnp.float32)

    # edge_index: ring (both directions) + a few random extra edges
    ring_src = jnp.arange(N)
    ring_dst = (jnp.arange(N) + 1) % N
    extra_src = jax.random.randint(k_e, (8,), 0, N)
    extra_dst = (extra_src + 5) % N
    src = jnp.concatenate([ring_src, ring_dst, extra_src])
    dst = jnp.concatenate([ring_dst, ring_src, extra_dst])

    # Dense adjacency (glue, not hot path): A[dst, src] += 1
    A = jnp.zeros((N, N), jnp.float32).at[dst, src].add(1.0)

    # Parameters for 3 SAGEConv layers (lin_l with bias, lin_r without bias)
    params = []
    for k, (fi, fo) in zip((k1, k2, k3),
                           ((in_channels, hidden_channels),
                            (hidden_channels, hidden_channels),
                            (hidden_channels, out_channels))):
        kl, kr = jax.random.split(k)
        Wl, b = init_linear(kl, fi, fo, with_bias=True)
        Wr, _ = init_linear(kr, fi, fo, with_bias=False)
        params.append((Wl, Wr, b))

    out = gcn2_forward(x, A, params)
    out = jax.block_until_ready(out)

    assert out.shape == (N, out_channels)
    # log_softmax rows should (approximately) exp-sum to 1
    assert jnp.allclose(jnp.sum(jnp.exp(out), axis=-1), 1.0, atol=1e-3)
    print("KERNEL_OK")
</pallas_src>

<mosaic_0001>
module attributes {stable_mosaic.version = 11 : i64} {
  func.func @sage_layer_kernel(%arg0: i32, %arg1: i32, %arg2: memref<256x256xi8, #tpu.memory_space<vmem>>, %arg3: memref<256x128xbf16, #tpu.memory_space<vmem>>, %arg4: memref<256x128xbf16, #tpu.memory_space<vmem>>, %arg5: memref<128x128xbf16, #tpu.memory_space<vmem>>, %arg6: memref<128x128xbf16, #tpu.memory_space<vmem>>, %arg7: memref<1x128xf32, #tpu.memory_space<vmem>>, %arg8: memref<256x128xbf16, #tpu.memory_space<vmem>>, %arg9: memref<256x128xf32, #tpu.memory_space<vmem>>) attributes {dimension_semantics = [#tpu.dimension_semantics<parallel>, #tpu.dimension_semantics<arbitrary>], iteration_bounds = array<i64: 1, 1>, scalar_prefetch = 0 : i64, scratch_operands = 1 : i64, tpu.core_type = #tpu.core_type<tc>, window_params = [{transform_indices = @transform_0, window_bounds = array<i64: 256, 256>}, {pipeline_mode = #tpu.pipeline_mode<synchronous>, transform_indices = @transform_1, window_bounds = array<i64: 256, 128>}, {transform_indices = @transform_2, window_bounds = array<i64: 256, 128>}, {pipeline_mode = #tpu.pipeline_mode<synchronous>, transform_indices = @transform_3, window_bounds = array<i64: 128, 128>}, {pipeline_mode = #tpu.pipeline_mode<synchronous>, transform_indices = @transform_4, window_bounds = array<i64: 128, 128>}, {pipeline_mode = #tpu.pipeline_mode<synchronous>, transform_indices = @transform_5, window_bounds = array<i64: 1, 128>}, {transform_indices = @transform_6, window_bounds = array<i64: 256, 128>}]} {
    %c0_i32 = arith.constant 0 : i32
    %0 = arith.cmpi eq, %arg1, %c0_i32 : i32
    %1 = arith.extui %0 : i1 to i32
    %c0_i32_0 = arith.constant 0 : i32
    %2 = arith.cmpi ne, %1, %c0_i32_0 : i32
    scf.if %2 {
      %cst_9 = arith.constant 0.000000e+00 : f32
      %16 = vector.broadcast %cst_9 : f32 to vector<256x128xf32>
      %c0_10 = arith.constant 0 : index
      %c0_11 = arith.constant 0 : index
      %17 = vector.load %arg9[%c0_10, %c0_11] : memref<256x128xf32, #tpu.memory_space<vmem>>, vector<256x128xf32>
      tpu.vector_store %arg9[%c0_10, %c0_11], %16 {strides = array<i32>} : memref<256x128xf32, #tpu.memory_space<vmem>>, vector<256x128xf32>,
    } else {
    }
    %c256_i32 = arith.constant 256 : i32
    %3 = arith.muli %arg1, %c256_i32 : i32
    %4 = tpu.assume_multiple %3, 256 : i32
    %5 = arith.index_cast %4 : i32 to index
    %c0 = arith.constant 0 : index
    %6 = vector.load %arg3[%5, %c0] : memref<256x128xbf16, #tpu.memory_space<vmem>>, vector<256x128xbf16>
    %c0_1 = arith.constant 0 : index
    %c0_2 = arith.constant 0 : index
    %7 = vector.load %arg2[%c0_1, %c0_2] : memref<256x256xi8, #tpu.memory_space<vmem>>, vector<256x256xi8>
    %8 = arith.sitofp %7 : vector<256x256xi8> to vector<256x256xbf16>
    %c0_3 = arith.constant 0 : index
    %c0_4 = arith.constant 0 : index
    %9 = vector.load %arg9[%c0_3, %c0_4] : memref<256x128xf32, #tpu.memory_space<vmem>>, vector<256x128xf32>
    %cst = arith.constant dense<0.000000e+00> : vector<256x128xf32>
    %10 = tpu.matmul %8, %6, %cst {dimension_numbers = #tpu.dot_dimension_numbers<[1], [0], [0], [1], [0, 0, 1, 1], [], []>} : vector<256x256xbf16>, vector<256x128xbf16>, vector<256x128xf32> -> vector<256x128xf32>
    %11 = arith.addf %9, %10 : vector<256x128xf32>
    %c0_5 = arith.constant 0 : index
    %c0_6 = arith.constant 0 : index
    %12 = vector.load %arg9[%c0_5, %c0_6] : memref<256x128xf32, #tpu.memory_space<vmem>>, vector<256x128xf32>
    tpu.vector_store %arg9[%c0_5, %c0_6], %11 {strides = array<i32>} : memref<256x128xf32, #tpu.memory_space<vmem>>, vector<256x128xf32>,
    %c0_i32_7 = arith.constant 0 : i32
    %13 = arith.cmpi eq, %arg1, %c0_i32_7 : i32
    %14 = arith.extui %13 : i1 to i32
    %c0_i32_8 = arith.constant 0 : i32
    %15 = arith.cmpi ne, %14, %c0_i32_8 : i32
    scf.if %15 {
      %c0_9 = arith.constant 0 : index
      %c0_10 = arith.constant 0 : index
      %16 = vector.load %arg9[%c0_9, %c0_10] : memref<256x128xf32, #tpu.memory_space<vmem>>, vector<256x128xf32>
      %17 = arith.truncf %16 : vector<256x128xf32> to vector<256x128xbf16>
      %c0_11 = arith.constant 0 : index
      %c0_12 = arith.constant 0 : index
      %18 = vector.load %arg5[%c0_11, %c0_12] : memref<128x128xbf16, #tpu.memory_space<vmem>>, vector<128x128xbf16>
      %cst_13 = arith.constant dense<0.000000e+00> : vector<256x128xf32>
      %19 = tpu.matmul %17, %18, %cst_13 {dimension_numbers = #tpu.dot_dimension_numbers<[1], [0], [0], [1], [0, 0, 1, 1], [], []>} : vector<256x128xbf16>, vector<128x128xbf16>, vector<256x128xf32> -> vector<256x128xf32>
      %c0_14 = arith.constant 0 : index
      %c0_15 = arith.constant 0 : index
      %20 = vector.load %arg7[%c0_14, %c0_15] : memref<1x128xf32, #tpu.memory_space<vmem>>, vector<1x128xf32>
      %21 = vector.broadcast %20 : vector<1x128xf32> to vector<256x128xf32>
      %22 = arith.addf %19, %21 : vector<256x128xf32>
      %c0_16 = arith.constant 0 : index
      %c0_17 = arith.constant 0 : index
      %23 = vector.load %arg4[%c0_16, %c0_17] : memref<256x128xbf16, #tpu.memory_space<vmem>>, vector<256x128xbf16>
      %c0_18 = arith.constant 0 : index
      %c0_19 = arith.constant 0 : index
      %24 = vector.load %arg6[%c0_18, %c0_19] : memref<128x128xbf16, #tpu.memory_space<vmem>>, vector<128x128xbf16>
      %cst_20 = arith.constant dense<0.000000e+00> : vector<256x128xf32>
      %25 = tpu.matmul %23, %24, %cst_20 {dimension_numbers = #tpu.dot_dimension_numbers<[1], [0], [0], [1], [0, 0, 1, 1], [], []>} : vector<256x128xbf16>, vector<128x128xbf16>, vector<256x128xf32> -> vector<256x128xf32>
      %26 = arith.addf %22, %25 : vector<256x128xf32>
      %27 = arith.mulf %26, %26 : vector<256x128xf32>
      %cst_21 = arith.constant dense<0.000000e+00> : vector<256xf32>
      %28 = vector.multi_reduction <add>, %27, %cst_21 [1] : vector<256x128xf32> to vector<256xf32>
      %29 = vector.shape_cast %28 : vector<256xf32> to vector<256x1xf32>
      %cst_22 = arith.constant 1.000000e-24 : f32
      %30 = vector.broadcast %cst_22 : f32 to vector<256x1xf32>
      %31 = arith.maximumf %29, %30 : vector<256x1xf32>
      %32 = math.rsqrt %31 : vector<256x1xf32>
      %33 = vector.broadcast %32 : vector<256x1xf32> to vector<256x128xf32>
      %34 = arith.mulf %26, %33 : vector<256x128xf32>
      %cst_23 = arith.constant 0.000000e+00 : f32
      %35 = vector.broadcast %cst_23 : f32 to vector<256x128xf32>
      %36 = arith.maximumf %34, %35 : vector<256x128xf32>
      %37 = arith.truncf %36 : vector<256x128xf32> to vector<256x128xbf16>
      %c0_24 = arith.constant 0 : index
      %c0_25 = arith.constant 0 : index
      %38 = vector.load %arg8[%c0_24, %c0_25] : memref<256x128xbf16, #tpu.memory_space<vmem>>, vector<256x128xbf16>
      tpu.vector_store %arg8[%c0_24, %c0_25], %37 {strides = array<i32>} : memref<256x128xbf16, #tpu.memory_space<vmem>>, vector<256x128xbf16>,
    } else {
    }
    return
  }
  func.func @transform_0(%arg0: i32, %arg1: i32) -> (i32, i32) {
    %c0_i32 = arith.constant 0 : i32
    return %arg0, %arg1 : i32, i32
  }
  func.func @transform_1(%arg0: i32, %arg1: i32) -> (i32, i32) {
    %c0_i32 = arith.constant 0 : i32
    %c0_i32_0 = arith.constant 0 : i32
    %c0_i32_1 = arith.constant 0 : i32
    return %c0_i32, %c0_i32_0 : i32, i32
  }
  func.func @transform_2(%arg0: i32, %arg1: i32) -> (i32, i32) {
    %c0_i32 = arith.constant 0 : i32
    %c0_i32_0 = arith.constant 0 : i32
    return %arg0, %c0_i32 : i32, i32
  }
  func.func @transform_3(%arg0: i32, %arg1: i32) -> (i32, i32) {
    %c0_i32 = arith.constant 0 : i32
    %c0_i32_0 = arith.constant 0 : i32
    %c0_i32_1 = arith.constant 0 : i32
    return %c0_i32, %c0_i32_0 : i32, i32
  }
  func.func @transform_4(%arg0: i32, %arg1: i32) -> (i32, i32) {
    %c0_i32 = arith.constant 0 : i32
    %c0_i32_0 = arith.constant 0 : i32
    %c0_i32_1 = arith.constant 0 : i32
    return %c0_i32, %c0_i32_0 : i32, i32
  }
  func.func @transform_5(%arg0: i32, %arg1: i32) -> (i32, i32) {
    %c0_i32 = arith.constant 0 : i32
    %c0_i32_0 = arith.constant 0 : i32
    %c0_i32_1 = arith.constant 0 : i32
    return %c0_i32, %c0_i32_0 : i32, i32
  }
  func.func @transform_6(%arg0: i32, %arg1: i32) -> (i32, i32) {
    %c0_i32 = arith.constant 0 : i32
    %c0_i32_0 = arith.constant 0 : i32
    return %arg0, %c0_i32 : i32, i32
  }
}

</mosaic_0001>

<llo_original>
// kernel: tpu_custom_call.1
$region0: #{tpu_custom_call.1}
  #allocation0 [shape = 'u32[]', space=smem, size = 0x4, offset = 0x4, fixed_abs, tag = 'smem constant byte address 0x4 - core index']
  #allocation1 [shape = 'u32[144,128]{1,0:T(1,128)}', space=vmem, size = 0x12000, scoped, tag = 'internal scratch']
  #allocation2 [shape = 'f32[256,128]{1,0:T(8,128)}', space=vmem, size = 0x20000, scoped, tag = 'scratch operand']
  %s0 = inlined_call_operand.hbm [shape: s8[256,256], index: 0, kind: input, shape index: {}]
  %s1 = inlined_call_operand.hbm [shape: bf16[256,128], index: 1, kind: input, shape index: {}]
  %s2 = inlined_call_operand.hbm [shape: bf16[256,128], index: 2, kind: input, shape index: {}]
  %s3 = inlined_call_operand.hbm [shape: bf16[128,128], index: 3, kind: input, shape index: {}]
  %s4 = inlined_call_operand.hbm [shape: bf16[128,128], index: 4, kind: input, shape index: {}]
  %s5 = inlined_call_operand.vmem [shape: f32[1,128], index: 5, kind: input, shape index: {}]
  %s6 = inlined_call_operand.hbm [shape: bf16[256,128], index: 6, kind: output, shape index: {}]
  %s7 = sld [smem:[#allocation0]]
  $region62: #{tpu_custom_call.1} parent=0
    _
  %s9 = ssub.s32 1, %s7
  %s10 = scalar_select 0, %s9, %s7
  $region1: #{tpu_custom_call.1} parent=0
    #allocation3 [shape = 'u8[65536]{0}', space=vmem, size = 0x10000, scoped, tag = 'input window, operand 0, single buffered']
    #allocation4 [shape = 's32[1]{0}', space=sflag, size = 0x4, scoped, tag = 'scoped memory for tpu_custom_call.1']
    #allocation5 [shape = 's32[1]{0}', space=sflag, size = 0x4, scoped, tag = 'scoped memory for tpu_custom_call.1']
    #allocation6 [shape = 'u8[65536]{0}', space=vmem, size = 0x10000, scoped, tag = 'input window, operand 1, single buffered']
    #allocation7 [shape = 's32[1]{0}', space=sflag, size = 0x4, scoped, tag = 'scoped memory for tpu_custom_call.1']
    #allocation8 [shape = 'u8[65536]{0}', space=vmem, size = 0x10000, scoped, tag = 'input window, operand 2, single buffered']
    #allocation9 [shape = 'u8[32768]{0}', space=vmem, size = 0x8000, scoped, tag = 'input window, operand 3, single buffered']
    #allocation10 [shape = 's32[1]{0}', space=sflag, size = 0x4, scoped, tag = 'scoped memory for tpu_custom_call.1']
    #allocation11 [shape = 'u8[32768]{0}', space=vmem, size = 0x8000, scoped, tag = 'input window, operand 4, single buffered']
    #allocation12 [shape = 'u8[65536]{0}', space=vmem, size = 0x10000, scoped, tag = 'output window, operand 0, single buffered']
    %11 = vsyncpa [#allocation4], 0
    %12 = vsyncpa [#allocation7], 0
    %13 = vsyncpa [#allocation10], 0
    %14 = vsyncpa [#allocation5], 0
    // Predicated region
    $region2: #{tpu_custom_call.1} parent=1 // pred_check
      _
    $region3: #{tpu_custom_call.1} parent=1 // pred_check_branch
      %16 = sbr.rel (0) target = $region5
    $region4: #{tpu_custom_call.1} parent=1 // pred_region
      %s18 = ssub.s32 2048, 2048
      %19 = vsyncadd [#allocation4], %s18
      %s20 = sshll.u32 [#allocation3], 4
      %s21 = int_to_ptr.vmem [resolvable:$true] %s20
      %26 = dma.hbm_to_vmem [thread:$0]  %s0, 2048, %s21, [#allocation4], 256, 256, 16
    $region5: #{tpu_custom_call.1} parent=1 // pred_fallthru
      _
    // Predicated region
    $region6: #{tpu_custom_call.1} parent=1 // pred_check
      _
    $region7: #{tpu_custom_call.1} parent=1 // pred_check_branch
      %28 = sbr.rel (0) target = $region9
    $region8: #{tpu_custom_call.1} parent=1 // pred_region
      %s30 = ssub.s32 2048, 2048
      %31 = vsyncadd [#allocation7], %s30
      %s32 = sshll.u32 [#allocation6], 4
      %s33 = int_to_ptr.vmem [resolvable:$true] %s32
      %38 = dma.hbm_to_vmem [thread:$0]  %s1, 2048, %s33, [#allocation7], 64, 64, 4
    $region9: #{tpu_custom_call.1} parent=1 // pred_fallthru
      _
    // Predicated region
    $region10: #{tpu_custom_call.1} parent=1 // pred_check
      _
    $region11: #{tpu_custom_call.1} parent=1 // pred_check_branch
      %40 = sbr.rel (0) target = $region13
    $region12: #{tpu_custom_call.1} parent=1 // pred_region
      %s42 = ssub.s32 2048, 2048
      %43 = vsyncadd [#allocation7], %s42
      %s44 = sshll.u32 [#allocation8], 4
      %s45 = int_to_ptr.vmem [resolvable:$true] %s44
      %50 = dma.hbm_to_vmem [thread:$0]  %s2, 2048, %s45, [#allocation7], 64, 64, 4
    $region13: #{tpu_custom_call.1} parent=1 // pred_fallthru
      _
    // Predicated region
    $region14: #{tpu_custom_call.1} parent=1 // pred_check
      _
    $region15: #{tpu_custom_call.1} parent=1 // pred_check_branch
      %52 = sbr.rel (0) target = $region17
    $region16: #{tpu_custom_call.1} parent=1 // pred_region
      %s54 = ssub.s32 1024, 1024
      %55 = vsyncadd [#allocation10], %s54
      %s56 = sshll.u32 [#allocation9], 4
      %s57 = int_to_ptr.vmem [resolvable:$true] %s56
      %62 = dma.hbm_to_vmem [thread:$0]  %s3, 1024, %s57, [#allocation10], 64, 64, 4
    $region17: #{tpu_custom_call.1} parent=1 // pred_fallthru
      _
    // Predicated region
    $region18: #{tpu_custom_call.1} parent=1 // pred_check
      _
    $region19: #{tpu_custom_call.1} parent=1 // pred_check_branch
      %64 = sbr.rel (0) target = $region21
    $region20: #{tpu_custom_call.1} parent=1 // pred_region
      %s66 = ssub.s32 1024, 1024
      %67 = vsyncadd [#allocation10], %s66
      %s68 = sshll.u32 [#allocation11], 4
      %s69 = int_to_ptr.vmem [resolvable:$true] %s68
      %74 = dma.hbm_to_vmem [thread:$0]  %s4, 1024, %s69, [#allocation10], 64, 64, 4
    $region21: #{tpu_custom_call.1} parent=1 // pred_fallthru
      _
    // Predicated region
    $region22: #{tpu_custom_call.1} parent=1 // pred_check
      _
    $region23: #{tpu_custom_call.1} parent=1 // pred_check_branch
      %76 = sbr.rel (0) target = $region25
    $region24: #{tpu_custom_call.1} parent=1 // pred_region
      _
    $region25: #{tpu_custom_call.1} parent=1 // pred_fallthru
      _
    // Predicated region
    $region26: #{tpu_custom_call.1} parent=1 // pred_check
      _
    $region27: #{tpu_custom_call.1} parent=1 // pred_check_branch
      %78 = sbr.rel (0) target = $region29
    $region28: #{tpu_custom_call.1} parent=1 // pred_region
      %79 = dma.done [#allocation4], 2048
    $region29: #{tpu_custom_call.1} parent=1 // pred_fallthru
      _
    // Predicated region
    $region30: #{tpu_custom_call.1} parent=1 // pred_check
      _
    $region31: #{tpu_custom_call.1} parent=1 // pred_check_branch
      %81 = sbr.rel (0) target = $region33
    $region32: #{tpu_custom_call.1} parent=1 // pred_region
      %82 = dma.done [#allocation7], 2048
    $region33: #{tpu_custom_call.1} parent=1 // pred_fallthru
      _
    // Predicated region
    $region34: #{tpu_custom_call.1} parent=1 // pred_check
      _
    $region35: #{tpu_custom_call.1} parent=1 // pred_check_branch
      %84 = sbr.rel (0) target = $region37
    $region36: #{tpu_custom_call.1} parent=1 // pred_region
      %85 = dma.done [#allocation7], 2048
    $region37: #{tpu_custom_call.1} parent=1 // pred_fallthru
      _
    // Predicated region
    $region38: #{tpu_custom_call.1} parent=1 // pred_check
      _
    $region39: #{tpu_custom_call.1} parent=1 // pred_check_branch
      %87 = sbr.rel (0) target = $region41
    $region40: #{tpu_custom_call.1} parent=1 // pred_region
      %88 = dma.done [#allocation10], 1024
    $region41: #{tpu_custom_call.1} parent=1 // pred_fallthru
      _
    // Predicated region
    $region42: #{tpu_custom_call.1} parent=1 // pred_check
      _
    $region43: #{tpu_custom_call.1} parent=1 // pred_check_branch
      %90 = sbr.rel (0) target = $region45
    $region44: #{tpu_custom_call.1} parent=1 // pred_region
      %91 = dma.done [#allocation10], 1024
    $region45: #{tpu_custom_call.1} parent=1 // pred_fallthru
      _
    %p93 = scmp.eq.s32.totalorder 0, 0
    // Predicated region
    $region46: #{tpu_custom_call.1} parent=1 // pred_check
      %p94 = pneg %p93
    $region47: #{tpu_custom_call.1} parent=1 // pred_check_branch
      %96 = sbr.rel (%p94) target = $region49
    $region48: #{tpu_custom_call.1} parent=1 // pred_region
      %97 = vst [vmem:[#allocation2] sm:$0xff] 0.0
      %98 = vst [vmem:[#allocation2 + $0x8] sm:$0xff] 0.0
      %99 = vst [vmem:[#allocation2 + $0x10] sm:$0xff] 0.0
      %100 = vst [vmem:[#allocation2 + $0x18] sm:$0xff] 0.0
      %101 = vst [vmem:[#allocation2 + $0x20] sm:$0xff] 0.0
      %102 = vst [vmem:[#allocation2 + $0x28] sm:$0xff] 0.0
      %103 = vst [vmem:[#allocation2 + $0x30] sm:$0xff] 0.0
      %104 = vst [vmem:[#allocation2 + $0x38] sm:$0xff] 0.0
      %105 = vst [vmem:[#allocation2 + $0x40] sm:$0xff] 0.0
      %106 = vst [vmem:[#allocation2 + $0x48] sm:$0xff] 0.0
      %107 = vst [vmem:[#allocation2 + $0x50] sm:$0xff] 0.0
      %108 = vst [vmem:[#allocation2 + $0x58] sm:$0xff] 0.0
      %109 = vst [vmem:[#allocation2 + $0x60] sm:$0xff] 0.0
      %110 = vst [vmem:[#allocation2 + $0x68] sm:$0xff] 0.0
      %111 = vst [vmem:[#allocation2 + $0x70] sm:$0xff] 0.0
      %112 = vst [vmem:[#allocation2 + $0x78] sm:$0xff] 0.0
      %113 = vst [vmem:[#allocation2 + $0x80] sm:$0xff] 0.0
      %114 = vst [vmem:[#allocation2 + $0x88] sm:$0xff] 0.0
      %115 = vst [vmem:[#allocation2 + $0x90] sm:$0xff] 0.0
      %116 = vst [vmem:[#allocation2 + $0x98] sm:$0xff] 0.0
      %117 = vst [vmem:[#allocation2 + $0xa0] sm:$0xff] 0.0
      %118 = vst [vmem:[#allocation2 + $0xa8] sm:$0xff] 0.0
      %119 = vst [vmem:[#allocation2 + $0xb0] sm:$0xff] 0.0
      %120 = vst [vmem:[#allocation2 + $0xb8] sm:$0xff] 0.0
      %121 = vst [vmem:[#allocation2 + $0xc0] sm:$0xff] 0.0
      %122 = vst [vmem:[#allocation2 + $0xc8] sm:$0xff] 0.0
      %123 = vst [vmem:[#allocation2 + $0xd0] sm:$0xff] 0.0
      %124 = vst [vmem:[#allocation2 + $0xd8] sm:$0xff] 0.0
      %125 = vst [vmem:[#allocation2 + $0xe0] sm:$0xff] 0.0
      %126 = vst [vmem:[#allocation2 + $0xe8] sm:$0xff] 0.0
      %127 = vst [vmem:[#allocation2 + $0xf0] sm:$0xff] 0.0
      %128 = vst [vmem:[#allocation2 + $0xf8] sm:$0xff] 0.0
    $region49: #{tpu_custom_call.1} parent=1 // pred_fallthru
      _
    %s129 = smul.u32 0, 256
    %s130 = sshra.s32 %s129, 3
    %s131 = sand.u32 %s129, 7
    %s132 = smul.addr %s130, 4
    %s133 = scalar_lea.vmem [#allocation6], %s132
    %v134 = vld [vmem:[%s133] sm:$0xf]
    %v135 = vld [vmem:[%s133 + $0x4] sm:$0xf]
    %v136 = vld [vmem:[%s133 + $0x8] sm:$0xf]
    %v137 = vld [vmem:[%s133 + $0xc] sm:$0xf]
    %v138 = vld [vmem:[%s133 + $0x10] sm:$0xf]
    %v139 = vld [vmem:[%s133 + $0x14] sm:$0xf]
    %v140 = vld [vmem:[%s133 + $0x18] sm:$0xf]
    %v141 = vld [vmem:[%s133 + $0x1c] sm:$0xf]
    %v142 = vld [vmem:[%s133 + $0x20] sm:$0xf]
    %v143 = vld [vmem:[%s133 + $0x24] sm:$0xf]
    %v144 = vld [vmem:[%s133 + $0x28] sm:$0xf]
    %v145 = vld [vmem:[%s133 + $0x2c] sm:$0xf]
    %v146 = vld [vmem:[%s133 + $0x30] sm:$0xf]
    %v147 = vld [vmem:[%s133 + $0x34] sm:$0xf]
    %v148 = vld [vmem:[%s133 + $0x38] sm:$0xf]
    %v149 = vld [vmem:[%s133 + $0x3c] sm:$0xf]
    %v150 = vld [vmem:[%s133 + $0x40] sm:$0xf]
    %v151 = vld [vmem:[%s133 + $0x44] sm:$0xf]
    %v152 = vld [vmem:[%s133 + $0x48] sm:$0xf]
    %v153 = vld [vmem:[%s133 + $0x4c] sm:$0xf]
    %v154 = vld [vmem:[%s133 + $0x50] sm:$0xf]
    %v155 = vld [vmem:[%s133 + $0x54] sm:$0xf]
    %v156 = vld [vmem:[%s133 + $0x58] sm:$0xf]
    %v157 = vld [vmem:[%s133 + $0x5c] sm:$0xf]
    %v158 = vld [vmem:[%s133 + $0x60] sm:$0xf]
    %v159 = vld [vmem:[%s133 + $0x64] sm:$0xf]
    %v160 = vld [vmem:[%s133 + $0x68] sm:$0xf]
    %v161 = vld [vmem:[%s133 + $0x6c] sm:$0xf]
    %v162 = vld [vmem:[%s133 + $0x70] sm:$0xf]
    %v163 = vld [vmem:[%s133 + $0x74] sm:$0xf]
    %v164 = vld [vmem:[%s133 + $0x78] sm:$0xf]
    %v165 = vld [vmem:[%s133 + $0x7c] sm:$0xf]
    %v166 = vld [vmem:[#allocation3] sm:$0xff]
    %v167 = vld [vmem:[#allocation3 + $0x8] sm:$0xff]
    %v168 = vld [vmem:[#allocation3 + $0x10] sm:$0xff]
    %v169 = vld [vmem:[#allocation3 + $0x18] sm:$0xff]
    %v170 = vld [vmem:[#allocation3 + $0x20] sm:$0xff]
    %v171 = vld [vmem:[#allocation3 + $0x28] sm:$0xff]
    %v172 = vld [vmem:[#allocation3 + $0x30] sm:$0xff]
    %v173 = vld [vmem:[#allocation3 + $0x38] sm:$0xff]
    %v174 = vld [vmem:[#allocation3 + $0x40] sm:$0xff]
    %v175 = vld [vmem:[#allocation3 + $0x48] sm:$0xff]
    %v176 = vld [vmem:[#allocation3 + $0x50] sm:$0xff]
    %v177 = vld [vmem:[#allocation3 + $0x58] sm:$0xff]
    %v178 = vld [vmem:[#allocation3 + $0x60] sm:$0xff]
    %v179 = vld [vmem:[#allocation3 + $0x68] sm:$0xff]
    %v180 = vld [vmem:[#allocation3 + $0x70] sm:$0xff]
    %v181 = vld [vmem:[#allocation3 + $0x78] sm:$0xff]
    %v182 = vunpack.c.l.s8.bf16 %v166
    %v183 = vunpack.c.l.s8.bf16 %v167
    %v184 = vunpack.c.h.s8.bf16 %v166
    %v185 = vunpack.c.h.s8.bf16 %v167
    %v186 = vunpack.c.l.s8.bf16 %v168
    %v187 = vunpack.c.l.s8.bf16 %v169
    %v188 = vunpack.c.h.s8.bf16 %v168
    %v189 = vunpack.c.h.s8.bf16 %v169
    %v190 = vunpack.c.l.s8.bf16 %v170
    %v191 = vunpack.c.l.s8.bf16 %v171
    %v192 = vunpack.c.h.s8.bf16 %v170
    %v193 = vunpack.c.h.s8.bf16 %v171
    %v194 = vunpack.c.l.s8.bf16 %v172
    %v195 = vunpack.c.l.s8.bf16 %v173
    %v196 = vunpack.c.h.s8.bf16 %v172
    %v197 = vunpack.c.h.s8.bf16 %v173
    %v198 = vunpack.c.l.s8.bf16 %v174
    %v199 = vunpack.c.l.s8.bf16 %v175
    %v200 = vunpack.c.h.s8.bf16 %v174
    %v201 = vunpack.c.h.s8.bf16 %v175
    %v202 = vunpack.c.l.s8.bf16 %v176
    %v203 = vunpack.c.l.s8.bf16 %v177
    %v204 = vunpack.c.h.s8.bf16 %v176
    %v205 = vunpack.c.h.s8.bf16 %v177
    %v206 = vunpack.c.l.s8.bf16 %v178
    %v207 = vunpack.c.l.s8.bf16 %v179
    %v208 = vunpack.c.h.s8.bf16 %v178
    %v209 = vunpack.c.h.s8.bf16 %v179
    %v210 = vunpack.c.l.s8.bf16 %v180
    %v211 = vunpack.c.l.s8.bf16 %v181
    %v212 = vunpack.c.h.s8.bf16 %v180
    %v213 = vunpack.c.h.s8.bf16 %v181
    %v214 = vld [vmem:[#allocation2] sm:$0xff]
    %v215 = vld [vmem:[#allocation2 + $0x8] sm:$0xff]
    %v216 = vld [vmem:[#allocation2 + $0x10] sm:$0xff]
    %v217 = vld [vmem:[#allocation2 + $0x18] sm:$0xff]
    %v218 = vld [vmem:[#allocation2 + $0x20] sm:$0xff]
    %v219 = vld [vmem:[#allocation2 + $0x28] sm:$0xff]
    %v220 = vld [vmem:[#allocation2 + $0x30] sm:$0xff]
    %v221 = vld [vmem:[#allocation2 + $0x38] sm:$0xff]
    %v222 = vld [vmem:[#allocation2 + $0x40] sm:$0xff]
    %v223 = vld [vmem:[#allocation2 + $0x48] sm:$0xff]
    %v224 = vld [vmem:[#allocation2 + $0x50] sm:$0xff]
    %v225 = vld [vmem:[#allocation2 + $0x58] sm:$0xff]
    %v226 = vld [vmem:[#allocation2 + $0x60] sm:$0xff]
    %v227 = vld [vmem:[#allocation2 + $0x68] sm:$0xff]
    %v228 = vld [vmem:[#allocation2 + $0x70] sm:$0xff]
    %v229 = vld [vmem:[#allocation2 + $0x78] sm:$0xff]
    %v230 = vld [vmem:[#allocation2 + $0x80] sm:$0xff]
    %v231 = vld [vmem:[#allocation2 + $0x88] sm:$0xff]
    %v232 = vld [vmem:[#allocation2 + $0x90] sm:$0xff]
    %v233 = vld [vmem:[#allocation2 + $0x98] sm:$0xff]
    %v234 = vld [vmem:[#allocation2 + $0xa0] sm:$0xff]
    %v235 = vld [vmem:[#allocation2 + $0xa8] sm:$0xff]
    %v236 = vld [vmem:[#allocation2 + $0xb0] sm:$0xff]
    %v237 = vld [vmem:[#allocation2 + $0xb8] sm:$0xff]
    %v238 = vld [vmem:[#allocation2 + $0xc0] sm:$0xff]
    %v239 = vld [vmem:[#allocation2 + $0xc8] sm:$0xff]
    %v240 = vld [vmem:[#allocation2 + $0xd0] sm:$0xff]
    %v241 = vld [vmem:[#allocation2 + $0xd8] sm:$0xff]
    %v242 = vld [vmem:[#allocation2 + $0xe0] sm:$0xff]
    %v243 = vld [vmem:[#allocation2 + $0xe8] sm:$0xff]
    %v244 = vld [vmem:[#allocation2 + $0xf0] sm:$0xff]
    %v245 = vld [vmem:[#allocation2 + $0xf8] sm:$0xff]
    %v278 = vunpack.c.l.b16 %v134
    %v279 = vunpack.c.l.b16 %v135
    %v280 = vunpack.c.l.b16 %v136
    %v281 = vunpack.c.l.b16 %v137
    %v282 = vunpack.c.l.b16 %v138
    %v283 = vunpack.c.l.b16 %v139
    %v284 = vunpack.c.l.b16 %v140
    %v285 = vunpack.c.l.b16 %v141
    %v286 = vunpack.c.l.b16 %v142
    %v287 = vunpack.c.l.b16 %v143
    %v288 = vunpack.c.l.b16 %v144
    %v289 = vunpack.c.l.b16 %v145
    %v290 = vunpack.c.l.b16 %v146
    %v291 = vunpack.c.l.b16 %v147
    %v292 = vunpack.c.l.b16 %v148
    %v293 = vunpack.c.l.b16 %v149
    %v294 = vunpack.c.l.b16 %v150
    %v295 = vunpack.c.l.b16 %v151
    %v296 = vunpack.c.l.b16 %v152
    %v297 = vunpack.c.l.b16 %v153
    %v298 = vunpack.c.l.b16 %v154
    %v299 = vunpack.c.l.b16 %v155
    %v300 = vunpack.c.l.b16 %v156
    %v301 = vunpack.c.l.b16 %v157
    %v302 = vunpack.c.l.b16 %v158
    %v303 = vunpack.c.l.b16 %v159
    %v304 = vunpack.c.l.b16 %v160
    %v305 = vunpack.c.l.b16 %v161
    %v306 = vunpack.c.l.b16 %v162
    %v307 = vunpack.c.l.b16 %v163
    %v308 = vunpack.c.l.b16 %v164
    %v309 = vunpack.c.l.b16 %v165
    %v310 = vpack.c.b16 %v279, %v278
    %v311 = vpack.c.b16 %v281, %v280
    %v312 = vpack.c.b16 %v283, %v282
    %v313 = vpack.c.b16 %v285, %v284
    %v314 = vpack.c.b16 %v287, %v286
    %v315 = vpack.c.b16 %v289, %v288
    %v316 = vpack.c.b16 %v291, %v290
    %v317 = vpack.c.b16 %v293, %v292
    %v318 = vpack.c.b16 %v295, %v294
    %v319 = vpack.c.b16 %v297, %v296
    %v320 = vpack.c.b16 %v299, %v298
    %v321 = vpack.c.b16 %v301, %v300
    %v322 = vpack.c.b16 %v303, %v302
    %v323 = vpack.c.b16 %v305, %v304
    %v324 = vpack.c.b16 %v307, %v306
    %v325 = vpack.c.b16 %v309, %v308
    %342 = vmatprep.subr.bf16.mxu0 0
    %343 = vmatpush1.bf16.msra.mxu0 %v310
    %344 = vmatprep.subr.bf16.mxu0 0
    %345 = vmatpush1.bf16.msra.mxu0 %v311
    %346 = vmatprep.subr.bf16.mxu0 0
    %347 = vmatpush1.bf16.msra.mxu0 %v312
    %348 = vmatprep.subr.bf16.mxu0 0
    %349 = vmatpush1.bf16.msra.mxu0 %v313
    %350 = vmatprep.subr.bf16.mxu0 0
    %351 = vmatpush1.bf16.msra.mxu0 %v314
    %352 = vmatprep.subr.bf16.mxu0 0
    %353 = vmatpush1.bf16.msra.mxu0 %v315
    %354 = vmatprep.subr.bf16.mxu0 0
    %355 = vmatpush1.bf16.msra.mxu0 %v316
    %356 = vmatprep.subr.bf16.mxu0 0
    %357 = vmatpush1.bf16.msra.mxu0 %v317
    %358 = vmatprep.subr.bf16.mxu0 0
    %359 = vmatpush1.bf16.msra.mxu0 %v318
    %360 = vmatprep.subr.bf16.mxu0 0
    %361 = vmatpush1.bf16.msra.mxu0 %v319
    %362 = vmatprep.subr.bf16.mxu0 0
    %363 = vmatpush1.bf16.msra.mxu0 %v320
    %364 = vmatprep.subr.bf16.mxu0 0
    %365 = vmatpush1.bf16.msra.mxu0 %v321
    %366 = vmatprep.subr.bf16.mxu0 0
    %367 = vmatpush1.bf16.msra.mxu0 %v322
    %368 = vmatprep.subr.bf16.mxu0 0
    %369 = vmatpush1.bf16.msra.mxu0 %v323
    %370 = vmatprep.subr.bf16.mxu0 0
    %371 = vmatpush1.bf16.msra.mxu0 %v324
    %372 = vmatprep.subr.bf16.mxu0 0
    %373 = vmatpush1.bf16.msra.mxu0 %v325
    %374 = vmatprep.mubr.bf16.mxu0 %v183
    %375 = vmatmul.mubr.bf16.gmra.mrb[0].mxu0 %v182
    %v376 = vpop.f32.mrb[0].mxu0
    %v377 = vadd.f32 0.0, %v376
    %v378 = vpop.f32.mrb[0].mxu0
    %v379 = vpop.f32.mrb[0].mxu0
    %v380 = vadd.f32 0.0, %v379
    %v381 = vpop.f32.mrb[0].mxu0
    %382 = vmatprep.mubr.bf16.mxu0 %v185
    %383 = vmatmul.mubr.bf16.gmra.mrb[0].mxu0 %v184
    %v384 = vpop.f32.mrb[0].mxu0
    %v385 = vadd.f32 0.0, %v384
    %v386 = vpop.f32.mrb[0].mxu0
    %v387 = vpop.f32.mrb[0].mxu0
    %v388 = vadd.f32 0.0, %v387
    %v389 = vpop.f32.mrb[0].mxu0
    %390 = vmatprep.mubr.bf16.mxu0 %v187
    %391 = vmatmul.mubr.bf16.gmra.mrb[0].mxu0 %v186
    %v392 = vpop.f32.mrb[0].mxu0
    %v393 = vadd.f32 0.0, %v392
    %v394 = vpop.f32.mrb[0].mxu0
    %v395 = vpop.f32.mrb[0].mxu0
    %v396 = vadd.f32 0.0, %v395
    %v397 = vpop.f32.mrb[0].mxu0
    %398 = vmatprep.mubr.bf16.mxu0 %v189
    %399 = vmatmul.mubr.bf16.gmra.mrb[0].mxu0 %v188
    %v400 = vpop.f32.mrb[0].mxu0
    %v401 = vadd.f32 0.0, %v400
    %v402 = vpop.f32.mrb[0].mxu0
    %v403 = vpop.f32.mrb[0].mxu0
    %v404 = vadd.f32 0.0, %v403
    %v405 = vpop.f32.mrb[0].mxu0
    %406 = vmatprep.mubr.bf16.mxu0 %v191
    %407 = vmatmul.mubr.bf16.gmra.mrb[0].mxu0 %v190
    %v408 = vpop.f32.mrb[0].mxu0
    %v409 = vadd.f32 0.0, %v408
    %v410 = vpop.f32.mrb[0].mxu0
    %v411 = vpop.f32.mrb[0].mxu0
    %v412 = vadd.f32 0.0, %v411
    %v413 = vpop.f32.mrb[0].mxu0
    %414 = vmatprep.mubr.bf16.mxu0 %v193
    %415 = vmatmul.mubr.bf16.gmra.mrb[0].mxu0 %v192
    %v416 = vpop.f32.mrb[0].mxu0
    %v417 = vadd.f32 0.0, %v416
    %v418 = vpop.f32.mrb[0].mxu0
    %v419 = vpop.f32.mrb[0].mxu0
    %v420 = vadd.f32 0.0, %v419
    %v421 = vpop.f32.mrb[0].mxu0
    %422 = vmatprep.mubr.bf16.mxu0 %v195
    %423 = vmatmul.mubr.bf16.gmra.mrb[0].mxu0 %v194
    %v424 = vpop.f32.mrb[0].mxu0
    %v425 = vadd.f32 0.0, %v424
    %v426 = vpop.f32.mrb[0].mxu0
    %v427 = vpop.f32.mrb[0].mxu0
    %v428 = vadd.f32 0.0, %v427
    %v429 = vpop.f32.mrb[0].mxu0
    %430 = vmatprep.mubr.bf16.mxu0 %v197
    %431 = vmatmul.mubr.bf16.gmra.mrb[0].mxu0 %v196
    %v432 = vpop.f32.mrb[0].mxu0
    %v433 = vadd.f32 0.0, %v432
    %v434 = vpop.f32.mrb[0].mxu0
    %v435 = vpop.f32.mrb[0].mxu0
    %v436 = vadd.f32 0.0, %v435
    %v437 = vpop.f32.mrb[0].mxu0
    %438 = vmatprep.mubr.bf16.mxu0 %v199
    %439 = vmatmul.mubr.bf16.gmra.mrb[0].mxu0 %v198
    %v440 = vpop.f32.mrb[0].mxu0
    %v441 = vadd.f32 0.0, %v440
    %v442 = vpop.f32.mrb[0].mxu0
    %v443 = vpop.f32.mrb[0].mxu0
    %v444 = vadd.f32 0.0, %v443
    %v445 = vpop.f32.mrb[0].mxu0
    %446 = vmatprep.mubr.bf16.mxu0 %v201
    %447 = vmatmul.mubr.bf16.gmra.mrb[0].mxu0 %v200
    %v448 = vpop.f32.mrb[0].mxu0
    %v449 = vadd.f32 0.0, %v448
    %v450 = vpop.f32.mrb[0].mxu0
    %v451 = vpop.f32.mrb[0].mxu0
    %v452 = vadd.f32 0.0, %v451
    %v453 = vpop.f32.mrb[0].mxu0
    %454 = vmatprep.mubr.bf16.mxu0 %v203
    %455 = vmatmul.mubr.bf16.gmra.mrb[0].mxu0 %v202
    %v456 = vpop.f32.mrb[0].mxu0
    %v457 = vadd.f32 0.0, %v456
    %v458 = vpop.f32.mrb[0].mxu0
    %v459 = vpop.f32.mrb[0].mxu0
    %v460 = vadd.f32 0.0, %v459
    %v461 = vpop.f32.mrb[0].mxu0
    %462 = vmatprep.mubr.bf16.mxu0 %v205
    %463 = vmatmul.mubr.bf16.gmra.mrb[0].mxu0 %v204
    %v464 = vpop.f32.mrb[0].mxu0
    %v465 = vadd.f32 0.0, %v464
    %v466 = vpop.f32.mrb[0].mxu0
    %v467 = vpop.f32.mrb[0].mxu0
    %v468 = vadd.f32 0.0, %v467
    %v469 = vpop.f32.mrb[0].mxu0
    %470 = vmatprep.mubr.bf16.mxu0 %v207
    %471 = vmatmul.mubr.bf16.gmra.mrb[0].mxu0 %v206
    %v472 = vpop.f32.mrb[0].mxu0
    %v473 = vadd.f32 0.0, %v472
    %v474 = vpop.f32.mrb[0].mxu0
    %v475 = vpop.f32.mrb[0].mxu0
    %v476 = vadd.f32 0.0, %v475
    %v477 = vpop.f32.mrb[0].mxu0
    %478 = vmatprep.mubr.bf16.mxu0 %v209
    %479 = vmatmul.mubr.bf16.gmra.mrb[0].mxu0 %v208
    %v480 = vpop.f32.mrb[0].mxu0
    %v481 = vadd.f32 0.0, %v480
    %v482 = vpop.f32.mrb[0].mxu0
    %v483 = vpop.f32.mrb[0].mxu0
    %v484 = vadd.f32 0.0, %v483
    %v485 = vpop.f32.mrb[0].mxu0
    %486 = vmatprep.mubr.bf16.mxu0 %v211
    %487 = vmatmul.mubr.bf16.gmra.mrb[0].mxu0 %v210
    %v488 = vpop.f32.mrb[0].mxu0
    %v489 = vadd.f32 0.0, %v488
    %v490 = vpop.f32.mrb[0].mxu0
    %v491 = vpop.f32.mrb[0].mxu0
    %v492 = vadd.f32 0.0, %v491
    %v493 = vpop.f32.mrb[0].mxu0
    %494 = vmatprep.mubr.bf16.mxu0 %v213
    %495 = vmatmul.mubr.bf16.gmra.mrb[0].mxu0 %v212
    %v496 = vpop.f32.mrb[0].mxu0
    %v497 = vadd.f32 0.0, %v496
    %v498 = vpop.f32.mrb[0].mxu0
    %v499 = vpop.f32.mrb[0].mxu0
    %v500 = vadd.f32 0.0, %v499
    %v501 = vpop.f32.mrb[0].mxu0
    %502 = vdwg.mxu0
    %v503 = vadd.f32 %v214, %v377
    %v504 = vadd.f32 %v215, %v380
    %v505 = vadd.f32 %v216, %v385
    %v506 = vadd.f32 %v217, %v388
    %v507 = vadd.f32 %v218, %v393
    %v508 = vadd.f32 %v219, %v396
    %v509 = vadd.f32 %v220, %v401
    %v510 = vadd.f32 %v221, %v404
    %v511 = vadd.f32 %v222, %v409
    %v512 = vadd.f32 %v223, %v412
    %v513 = vadd.f32 %v224, %v417
    %v514 = vadd.f32 %v225, %v420
    %v515 = vadd.f32 %v226, %v425
    %v516 = vadd.f32 %v227, %v428
    %v517 = vadd.f32 %v228, %v433
    %v518 = vadd.f32 %v229, %v436
    %v519 = vadd.f32 %v230, %v441
    %v520 = vadd.f32 %v231, %v444
    %v521 = vadd.f32 %v232, %v449
    %v522 = vadd.f32 %v233, %v452
    %v523 = vadd.f32 %v234, %v457
    %v524 = vadd.f32 %v235, %v460
    %v525 = vadd.f32 %v236, %v465
    %v526 = vadd.f32 %v237, %v468
    %v527 = vadd.f32 %v238, %v473
    %v528 = vadd.f32 %v239, %v476
    %v529 = vadd.f32 %v240, %v481
    %v530 = vadd.f32 %v241, %v484
    %v531 = vadd.f32 %v242, %v489
    %v532 = vadd.f32 %v243, %v492
    %v533 = vadd.f32 %v244, %v497
    %v534 = vadd.f32 %v245, %v500
    %535 = vst [vmem:[#allocation2] sm:$0xff] %v503
    %536 = vst [vmem:[#allocation2 + $0x8] sm:$0xff] %v504
    %537 = vst [vmem:[#allocation2 + $0x10] sm:$0xff] %v505
    %538 = vst [vmem:[#allocation2 + $0x18] sm:$0xff] %v506
    %539 = vst [vmem:[#allocation2 + $0x20] sm:$0xff] %v507
    %540 = vst [vmem:[#allocation2 + $0x28] sm:$0xff] %v508
    %541 = vst [vmem:[#allocation2 + $0x30] sm:$0xff] %v509
    %542 = vst [vmem:[#allocation2 + $0x38] sm:$0xff] %v510
    %543 = vst [vmem:[#allocation2 + $0x40] sm:$0xff] %v511
    %544 = vst [vmem:[#allocation2 + $0x48] sm:$0xff] %v512
    %545 = vst [vmem:[#allocation2 + $0x50] sm:$0xff] %v513
    %546 = vst [vmem:[#allocation2 + $0x58] sm:$0xff] %v514
    %547 = vst [vmem:[#allocation2 + $0x60] sm:$0xff] %v515
    %548 = vst [vmem:[#allocation2 + $0x68] sm:$0xff] %v516
    %549 = vst [vmem:[#allocation2 + $0x70] sm:$0xff] %v517
    %550 = vst [vmem:[#allocation2 + $0x78] sm:$0xff] %v518
    %551 = vst [vmem:[#allocation2 + $0x80] sm:$0xff] %v519
    %552 = vst [vmem:[#allocation2 + $0x88] sm:$0xff] %v520
    %553 = vst [vmem:[#allocation2 + $0x90] sm:$0xff] %v521
    %554 = vst [vmem:[#allocation2 + $0x98] sm:$0xff] %v522
    %555 = vst [vmem:[#allocation2 + $0xa0] sm:$0xff] %v523
    %556 = vst [vmem:[#allocation2 + $0xa8] sm:$0xff] %v524
    %557 = vst [vmem:[#allocation2 + $0xb0] sm:$0xff] %v525
    %558 = vst [vmem:[#allocation2 + $0xb8] sm:$0xff] %v526
    %559 = vst [vmem:[#allocation2 + $0xc0] sm:$0xff] %v527
    %560 = vst [vmem:[#allocation2 + $0xc8] sm:$0xff] %v528
    %561 = vst [vmem:[#allocation2 + $0xd0] sm:$0xff] %v529
    %562 = vst [vmem:[#allocation2 + $0xd8] sm:$0xff] %v530
    %563 = vst [vmem:[#allocation2 + $0xe0] sm:$0xff] %v531
    %564 = vst [vmem:[#allocation2 + $0xe8] sm:$0xff] %v532
    %565 = vst [vmem:[#allocation2 + $0xf0] sm:$0xff] %v533
    %566 = vst [vmem:[#allocation2 + $0xf8] sm:$0xff] %v534
    // Predicated region
    $region50: #{tpu_custom_call.1} parent=1 // pred_check
      %p567 = pneg %p93
    $region51: #{tpu_custom_call.1} parent=1 // pred_check_branch
      %569 = sbr.rel (%p567) target = $region53
    $region52: #{tpu_custom_call.1} parent=1 // pred_region
      %v570 = vld [vmem:[#allocation2] sm:$0xff]
      %v571 = vld [vmem:[#allocation2 + $0x8] sm:$0xff]
      %v572 = vld [vmem:[#allocation2 + $0x10] sm:$0xff]
      %v573 = vld [vmem:[#allocation2 + $0x18] sm:$0xff]
      %v574 = vld [vmem:[#allocation2 + $0x20] sm:$0xff]
      %v575 = vld [vmem:[#allocation2 + $0x28] sm:$0xff]
      %v576 = vld [vmem:[#allocation2 + $0x30] sm:$0xff]
      %v577 = vld [vmem:[#allocation2 + $0x38] sm:$0xff]
      %v578 = vld [vmem:[#allocation2 + $0x40] sm:$0xff]
      %v579 = vld [vmem:[#allocation2 + $0x48] sm:$0xff]
      %v580 = vld [vmem:[#allocation2 + $0x50] sm:$0xff]
      %v581 = vld [vmem:[#allocation2 + $0x58] sm:$0xff]
      %v582 = vld [vmem:[#allocation2 + $0x60] sm:$0xff]
      %v583 = vld [vmem:[#allocation2 + $0x68] sm:$0xff]
      %v584 = vld [vmem:[#allocation2 + $0x70] sm:$0xff]
      %v585 = vld [vmem:[#allocation2 + $0x78] sm:$0xff]
      %v586 = vld [vmem:[#allocation2 + $0x80] sm:$0xff]
      %v587 = vld [vmem:[#allocation2 + $0x88] sm:$0xff]
      %v588 = vld [vmem:[#allocation2 + $0x90] sm:$0xff]
      %v589 = vld [vmem:[#allocation2 + $0x98] sm:$0xff]
      %v590 = vld [vmem:[#allocation2 + $0xa0] sm:$0xff]
      %v591 = vld [vmem:[#allocation2 + $0xa8] sm:$0xff]
      %v592 = vld [vmem:[#allocation2 + $0xb0] sm:$0xff]
      %v593 = vld [vmem:[#allocation2 + $0xb8] sm:$0xff]
      %v594 = vld [vmem:[#allocation2 + $0xc0] sm:$0xff]
      %v595 = vld [vmem:[#allocation2 + $0xc8] sm:$0xff]
      %v596 = vld [vmem:[#allocation2 + $0xd0] sm:$0xff]
      %v597 = vld [vmem:[#allocation2 + $0xd8] sm:$0xff]
      %v598 = vld [vmem:[#allocation2 + $0xe0] sm:$0xff]
      %v599 = vld [vmem:[#allocation2 + $0xe8] sm:$0xff]
      %v600 = vld [vmem:[#allocation2 + $0xf0] sm:$0xff]
      %v601 = vld [vmem:[#allocation2 + $0xf8] sm:$0xff]
      %v602 = vpack.c.bf16 %v571, %v570
      %v603 = vpack.c.bf16 %v573, %v572
      %v604 = vpack.c.bf16 %v575, %v574
      %v605 = vpack.c.bf16 %v577, %v576
      %v606 = vpack.c.bf16 %v579, %v578
      %v607 = vpack.c.bf16 %v581, %v580
      %v608 = vpack.c.bf16 %v583, %v582
      %v609 = vpack.c.bf16 %v585, %v584
      %v610 = vpack.c.bf16 %v587, %v586
      %v611 = vpack.c.bf16 %v589, %v588
      %v612 = vpack.c.bf16 %v591, %v590
      %v613 = vpack.c.bf16 %v593, %v592
      %v614 = vpack.c.bf16 %v595, %v594
      %v615 = vpack.c.bf16 %v597, %v596
      %v616 = vpack.c.bf16 %v599, %v598
      %v617 = vpack.c.bf16 %v601, %v600
      %v618 = vld [vmem:[#allocation9] sm:$0xf]
      %v619 = vld [vmem:[#allocation9 + $0x4] sm:$0xf]
      %v620 = vld [vmem:[#allocation9 + $0x8] sm:$0xf]
      %v621 = vld [vmem:[#allocation9 + $0xc] sm:$0xf]
      %v622 = vld [vmem:[#allocation9 + $0x10] sm:$0xf]
      %v623 = vld [vmem:[#allocation9 + $0x14] sm:$0xf]
      %v624 = vld [vmem:[#allocation9 + $0x18] sm:$0xf]
      %v625 = vld [vmem:[#allocation9 + $0x1c] sm:$0xf]
      %v626 = vld [vmem:[#allocation9 + $0x20] sm:$0xf]
      %v627 = vld [vmem:[#allocation9 + $0x24] sm:$0xf]
      %v628 = vld [vmem:[#allocation9 + $0x28] sm:$0xf]
      %v629 = vld [vmem:[#allocation9 + $0x2c] sm:$0xf]
      %v630 = vld [vmem:[#allocation9 + $0x30] sm:$0xf]
      %v631 = vld [vmem:[#allocation9 + $0x34] sm:$0xf]
      %v632 = vld [vmem:[#allocation9 + $0x38] sm:$0xf]
      %v633 = vld [vmem:[#allocation9 + $0x3c] sm:$0xf]
      %v634 = vld [vmem:[%s5] sm:$0x1]
      %v636 = vlaneseq
      %v637 = vshrl.u32 %v636, 7
      %v638 = vsub.s32 0, %v637
      %v639 = vrot.slane %v634, %v638
      %v657 = vunpack.c.l.b16 %v618
      %v658 = vunpack.c.l.b16 %v619
      %v659 = vunpack.c.l.b16 %v620
      %v660 = vunpack.c.l.b16 %v621
      %v661 = vunpack.c.l.b16 %v622
      %v662 = vunpack.c.l.b16 %v623
      %v663 = vunpack.c.l.b16 %v624
      %v664 = vunpack.c.l.b16 %v625
      %v665 = vunpack.c.l.b16 %v626
      %v666 = vunpack.c.l.b16 %v627
      %v667 = vunpack.c.l.b16 %v628
      %v668 = vunpack.c.l.b16 %v629
      %v669 = vunpack.c.l.b16 %v630
      %v670 = vunpack.c.l.b16 %v631
      %v671 = vunpack.c.l.b16 %v632
      %v672 = vunpack.c.l.b16 %v633
      %v673 = vpack.c.b16 %v658, %v657
      %v674 = vpack.c.b16 %v660, %v659
      %v675 = vpack.c.b16 %v662, %v661
      %v676 = vpack.c.b16 %v664, %v663
      %v677 = vpack.c.b16 %v666, %v665
      %v678 = vpack.c.b16 %v668, %v667
      %v679 = vpack.c.b16 %v670, %v669
      %v680 = vpack.c.b16 %v672, %v671
      %689 = vmatprep.subr.bf16.mxu0 0
      %690 = vmatpush1.bf16.msra.mxu0 %v673
      %691 = vmatprep.subr.bf16.mxu0 0
      %692 = vmatpush1.bf16.msra.mxu0 %v674
      %693 = vmatprep.subr.bf16.mxu0 0
      %694 = vmatpush1.bf16.msra.mxu0 %v675
      %695 = vmatprep.subr.bf16.mxu0 0
      %696 = vmatpush1.bf16.msra.mxu0 %v676
      %697 = vmatprep.subr.bf16.mxu0 0
      %698 = vmatpush1.bf16.msra.mxu0 %v677
      %699 = vmatprep.subr.bf16.mxu0 0
      %700 = vmatpush1.bf16.msra.mxu0 %v678
      %701 = vmatprep.subr.bf16.mxu0 0
      %702 = vmatpush1.bf16.msra.mxu0 %v679
      %703 = vmatprep.subr.bf16.mxu0 0
      %704 = vmatpush1.bf16.msra.mxu0 %v680
      %705 = vmatprep.subr.bf16.mxu0 0
      %706 = vmatpush1.bf16.msra.mxu0 0
      %707 = vmatprep.subr.bf16.mxu0 0
      %708 = vmatpush1.bf16.msra.mxu0 0
      %709 = vmatprep.subr.bf16.mxu0 0
      %710 = vmatpush1.bf16.msra.mxu0 0
      %711 = vmatprep.subr.bf16.mxu0 0
      %712 = vmatpush1.bf16.msra.mxu0 0
      %713 = vmatprep.subr.bf16.mxu0 0
      %714 = vmatpush1.bf16.msra.mxu0 0
      %715 = vmatprep.subr.bf16.mxu0 0
      %716 = vmatpush1.bf16.msra.mxu0 0
      %717 = vmatprep.subr.bf16.mxu0 0
      %718 = vmatpush1.bf16.msra.mxu0 0
      %719 = vmatprep.subr.bf16.mxu0 0
      %720 = vmatpush1.bf16.msra.mxu0 0
      %721 = vmatprep.mubr.bf16.mxu0 0
      %722 = vmatmul.mubr.bf16.gmra.mrb[0].mxu0 %v602
      %v723 = vpop.f32.mrb[0].mxu0
      %v724 = vadd.f32 %v639, %v723
      %v725 = vpop.f32.mrb[0].mxu0
      %v726 = vpop.f32.mrb[0].mxu0
      %v727 = vadd.f32 %v639, %v726
      %v728 = vpop.f32.mrb[0].mxu0
      %729 = vmatprep.mubr.bf16.mxu0 0
      %730 = vmatmul.mubr.bf16.gmra.mrb[0].mxu0 %v603
      %v731 = vpop.f32.mrb[0].mxu0
      %v732 = vadd.f32 %v639, %v731
      %v733 = vpop.f32.mrb[0].mxu0
      %v734 = vpop.f32.mrb[0].mxu0
      %v735 = vadd.f32 %v639, %v734
      %v736 = vpop.f32.mrb[0].mxu0
      %737 = vmatprep.mubr.bf16.mxu0 0
      %738 = vmatmul.mubr.bf16.gmra.mrb[0].mxu0 %v604
      %v739 = vpop.f32.mrb[0].mxu0
      %v740 = vadd.f32 %v639, %v739
      %v741 = vpop.f32.mrb[0].mxu0
      %v742 = vpop.f32.mrb[0].mxu0
      %v743 = vadd.f32 %v639, %v742
      %v744 = vpop.f32.mrb[0].mxu0
      %745 = vmatprep.mubr.bf16.mxu0 0
      %746 = vmatmul.mubr.bf16.gmra.mrb[0].mxu0 %v605
      %v747 = vpop.f32.mrb[0].mxu0
      %v748 = vadd.f32 %v639, %v747
      %v749 = vpop.f32.mrb[0].mxu0
      %v750 = vpop.f32.mrb[0].mxu0
      %v751 = vadd.f32 %v639, %v750
      %v752 = vpop.f32.mrb[0].mxu0
      %753 = vmatprep.mubr.bf16.mxu0 0
      %754 = vmatmul.mubr.bf16.gmra.mrb[0].mxu0 %v606
      %v755 = vpop.f32.mrb[0].mxu0
      %v756 = vadd.f32 %v639, %v755
      %v757 = vpop.f32.mrb[0].mxu0
      %v758 = vpop.f32.mrb[0].mxu0
      %v759 = vadd.f32 %v639, %v758
      %v760 = vpop.f32.mrb[0].mxu0
      %761 = vmatprep.mubr.bf16.mxu0 0
      %762 = vmatmul.mubr.bf16.gmra.mrb[0].mxu0 %v607
      %v763 = vpop.f32.mrb[0].mxu0
      %v764 = vadd.f32 %v639, %v763
      %v765 = vpop.f32.mrb[0].mxu0
      %v766 = vpop.f32.mrb[0].mxu0
      %v767 = vadd.f32 %v639, %v766
      %v768 = vpop.f32.mrb[0].mxu0
      %769 = vmatprep.mubr.bf16.mxu0 0
      %770 = vmatmul.mubr.bf16.gmra.mrb[0].mxu0 %v608
      %v771 = vpop.f32.mrb[0].mxu0
      %v772 = vadd.f32 %v639, %v771
      %v773 = vpop.f32.mrb[0].mxu0
      %v774 = vpop.f32.mrb[0].mxu0
      %v775 = vadd.f32 %v639, %v774
      %v776 = vpop.f32.mrb[0].mxu0
      %777 = vmatprep.mubr.bf16.mxu0 0
      %778 = vmatmul.mubr.bf16.gmra.mrb[0].mxu0 %v609
      %v779 = vpop.f32.mrb[0].mxu0
      %v780 = vadd.f32 %v639, %v779
      %v781 = vpop.f32.mrb[0].mxu0
      %v782 = vpop.f32.mrb[0].mxu0
      %v783 = vadd.f32 %v639, %v782
      %v784 = vpop.f32.mrb[0].mxu0
      %785 = vmatprep.mubr.bf16.mxu0 0
      %786 = vmatmul.mubr.bf16.gmra.mrb[0].mxu0 %v610
      %v787 = vpop.f32.mrb[0].mxu0
      %v788 = vadd.f32 %v639, %v787
      %v789 = vpop.f32.mrb[0].mxu0
      %v790 = vpop.f32.mrb[0].mxu0
      %v791 = vadd.f32 %v639, %v790
      %v792 = vpop.f32.mrb[0].mxu0
      %793 = vmatprep.mubr.bf16.mxu0 0
      %794 = vmatmul.mubr.bf16.gmra.mrb[0].mxu0 %v611
      %v795 = vpop.f32.mrb[0].mxu0
      %v796 = vadd.f32 %v639, %v795
      %v797 = vpop.f32.mrb[0].mxu0
      %v798 = vpop.f32.mrb[0].mxu0
      %v799 = vadd.f32 %v639, %v798
      %v800 = vpop.f32.mrb[0].mxu0
      %801 = vmatprep.mubr.bf16.mxu0 0
      %802 = vmatmul.mubr.bf16.gmra.mrb[0].mxu0 %v612
      %v803 = vpop.f32.mrb[0].mxu0
      %v804 = vadd.f32 %v639, %v803
      %v805 = vpop.f32.mrb[0].mxu0
      %v806 = vpop.f32.mrb[0].mxu0
      %v807 = vadd.f32 %v639, %v806
      %v808 = vpop.f32.mrb[0].mxu0
      %809 = vmatprep.mubr.bf16.mxu0 0
      %810 = vmatmul.mubr.bf16.gmra.mrb[0].mxu0 %v613
      %v811 = vpop.f32.mrb[0].mxu0
      %v812 = vadd.f32 %v639, %v811
      %v813 = vpop.f32.mrb[0].mxu0
      %v814 = vpop.f32.mrb[0].mxu0
      %v815 = vadd.f32 %v639, %v814
      %v816 = vpop.f32.mrb[0].mxu0
      %817 = vmatprep.mubr.bf16.mxu0 0
      %818 = vmatmul.mubr.bf16.gmra.mrb[0].mxu0 %v614
      %v819 = vpop.f32.mrb[0].mxu0
      %v820 = vadd.f32 %v639, %v819
      %v821 = vpop.f32.mrb[0].mxu0
      %v822 = vpop.f32.mrb[0].mxu0
      %v823 = vadd.f32 %v639, %v822
      %v824 = vpop.f32.mrb[0].mxu0
      %825 = vmatprep.mubr.bf16.mxu0 0
      %826 = vmatmul.mubr.bf16.gmra.mrb[0].mxu0 %v615
      %v827 = vpop.f32.mrb[0].mxu0
      %v828 = vadd.f32 %v639, %v827
      %v829 = vpop.f32.mrb[0].mxu0
      %v830 = vpop.f32.mrb[0].mxu0
      %v831 = vadd.f32 %v639, %v830
      %v832 = vpop.f32.mrb[0].mxu0
      %833 = vmatprep.mubr.bf16.mxu0 0
      %834 = vmatmul.mubr.bf16.gmra.mrb[0].mxu0 %v616
      %v835 = vpop.f32.mrb[0].mxu0
      %v836 = vadd.f32 %v639, %v835
      %v837 = vpop.f32.mrb[0].mxu0
      %v838 = vpop.f32.mrb[0].mxu0
      %v839 = vadd.f32 %v639, %v838
      %v840 = vpop.f32.mrb[0].mxu0
      %841 = vmatprep.mubr.bf16.mxu0 0
      %842 = vmatmul.mubr.bf16.gmra.mrb[0].mxu0 %v617
      %v843 = vpop.f32.mrb[0].mxu0
      %v844 = vadd.f32 %v639, %v843
      %v845 = vpop.f32.mrb[0].mxu0
      %v846 = vpop.f32.mrb[0].mxu0
      %v847 = vadd.f32 %v639, %v846
      %v848 = vpop.f32.mrb[0].mxu0
      %849 = vdwg.mxu0
      %v850 = vld [vmem:[#allocation8] sm:$0xf]
      %v851 = vld [vmem:[#allocation8 + $0x4] sm:$0xf]
      %v852 = vld [vmem:[#allocation8 + $0x8] sm:$0xf]
      %v853 = vld [vmem:[#allocation8 + $0xc] sm:$0xf]
      %v854 = vld [vmem:[#allocation8 + $0x10] sm:$0xf]
      %v855 = vld [vmem:[#allocation8 + $0x14] sm:$0xf]
      %v856 = vld [vmem:[#allocation8 + $0x18] sm:$0xf]
      %v857 = vld [vmem:[#allocation8 + $0x1c] sm:$0xf]
      %v858 = vld [vmem:[#allocation8 + $0x20] sm:$0xf]
      %v859 = vld [vmem:[#allocation8 + $0x24] sm:$0xf]
      %v860 = vld [vmem:[#allocation8 + $0x28] sm:$0xf]
      %v861 = vld [vmem:[#allocation8 + $0x2c] sm:$0xf]
      %v862 = vld [vmem:[#allocation8 + $0x30] sm:$0xf]
      %v863 = vld [vmem:[#allocation8 + $0x34] sm:$0xf]
      %v864 = vld [vmem:[#allocation8 + $0x38] sm:$0xf]
      %v865 = vld [vmem:[#allocation8 + $0x3c] sm:$0xf]
      %v866 = vld [vmem:[#allocation8 + $0x40] sm:$0xf]
      %v867 = vld [vmem:[#allocation8 + $0x44] sm:$0xf]
      %v868 = vld [vmem:[#allocation8 + $0x48] sm:$0xf]
      %v869 = vld [vmem:[#allocation8 + $0x4c] sm:$0xf]
      %v870 = vld [vmem:[#allocation8 + $0x50] sm:$0xf]
      %v871 = vld [vmem:[#allocation8 + $0x54] sm:$0xf]
      %v872 = vld [vmem:[#allocation8 + $0x58] sm:$0xf]
      %v873 = vld [vmem:[#allocation8 + $0x5c] sm:$0xf]
      %v874 = vld [vmem:[#allocation8 + $0x60] sm:$0xf]
      %v875 = vld [vmem:[#allocation8 + $0x64] sm:$0xf]
      %v876 = vld [vmem:[#allocation8 + $0x68] sm:$0xf]
      %v877 = vld [vmem:[#allocation8 + $0x6c] sm:$0xf]
      %v878 = vld [vmem:[#allocation8 + $0x70] sm:$0xf]
      %v879 = vld [vmem:[#allocation8 + $0x74] sm:$0xf]
      %v880 = vld [vmem:[#allocation8 + $0x78] sm:$0xf]
      %v881 = vld [vmem:[#allocation8 + $0x7c] sm:$0xf]
      %v882 = vld [vmem:[#allocation11] sm:$0xf]
      %v883 = vld [vmem:[#allocation11 + $0x4] sm:$0xf]
      %v884 = vld [vmem:[#allocation11 + $0x8] sm:$0xf]
      %v885 = vld [vmem:[#allocation11 + $0xc] sm:$0xf]
      %v886 = vld [vmem:[#allocation11 + $0x10] sm:$0xf]
      %v887 = vld [vmem:[#allocation11 + $0x14] sm:$0xf]
      %v888 = vld [vmem:[#allocation11 + $0x18] sm:$0xf]
      %v889 = vld [vmem:[#allocation11 + $0x1c] sm:$0xf]
      %v890 = vld [vmem:[#allocation11 + $0x20] sm:$0xf]
      %v891 = vld [vmem:[#allocation11 + $0x24] sm:$0xf]
      %v892 = vld [vmem:[#allocation11 + $0x28] sm:$0xf]
      %v893 = vld [vmem:[#allocation11 + $0x2c] sm:$0xf]
      %v894 = vld [vmem:[#allocation11 + $0x30] sm:$0xf]
      %v895 = vld [vmem:[#allocation11 + $0x34] sm:$0xf]
      %v896 = vld [vmem:[#allocation11 + $0x38] sm:$0xf]
      %v897 = vld [vmem:[#allocation11 + $0x3c] sm:$0xf]
      %v930 = vunpack.c.l.b16 %v850
      %v931 = vunpack.c.l.b16 %v851
      %v932 = vunpack.c.l.b16 %v852
      %v933 = vunpack.c.l.b16 %v853
      %v934 = vunpack.c.l.b16 %v854
      %v935 = vunpack.c.l.b16 %v855
      %v936 = vunpack.c.l.b16 %v856
      %v937 = vunpack.c.l.b16 %v857
      %v938 = vunpack.c.l.b16 %v858
      %v939 = vunpack.c.l.b16 %v859
      %v940 = vunpack.c.l.b16 %v860
      %v941 = vunpack.c.l.b16 %v861
      %v942 = vunpack.c.l.b16 %v862
      %v943 = vunpack.c.l.b16 %v863
      %v944 = vunpack.c.l.b16 %v864
      %v945 = vunpack.c.l.b16 %v865
      %v946 = vunpack.c.l.b16 %v866
      %v947 = vunpack.c.l.b16 %v867
      %v948 = vunpack.c.l.b16 %v868
      %v949 = vunpack.c.l.b16 %v869
      %v950 = vunpack.c.l.b16 %v870
      %v951 = vunpack.c.l.b16 %v871
      %v952 = vunpack.c.l.b16 %v872
      %v953 = vunpack.c.l.b16 %v873
      %v954 = vunpack.c.l.b16 %v874
      %v955 = vunpack.c.l.b16 %v875
      %v956 = vunpack.c.l.b16 %v876
      %v957 = vunpack.c.l.b16 %v877
      %v958 = vunpack.c.l.b16 %v878
      %v959 = vunpack.c.l.b16 %v879
      %v960 = vunpack.c.l.b16 %v880
      %v961 = vunpack.c.l.b16 %v881
      %v962 = vpack.c.b16 %v931, %v930
      %v963 = vpack.c.b16 %v933, %v932
      %v964 = vpack.c.b16 %v935, %v934
      %v965 = vpack.c.b16 %v937, %v936
      %v966 = vpack.c.b16 %v939, %v938
      %v967 = vpack.c.b16 %v941, %v940
      %v968 = vpack.c.b16 %v943, %v942
      %v969 = vpack.c.b16 %v945, %v944
      %v970 = vpack.c.b16 %v947, %v946
      %v971 = vpack.c.b16 %v949, %v948
      %v972 = vpack.c.b16 %v951, %v950
      %v973 = vpack.c.b16 %v953, %v952
      %v974 = vpack.c.b16 %v955, %v954
      %v975 = vpack.c.b16 %v957, %v956
      %v976 = vpack.c.b16 %v959, %v958
      %v977 = vpack.c.b16 %v961, %v960
      %v1010 = vunpack.c.l.b16 %v882
      %v1011 = vunpack.c.l.b16 %v883
      %v1012 = vunpack.c.l.b16 %v884
      %v1013 = vunpack.c.l.b16 %v885
      %v1014 = vunpack.c.l.b16 %v886
      %v1015 = vunpack.c.l.b16 %v887
      %v1016 = vunpack.c.l.b16 %v888
      %v1017 = vunpack.c.l.b16 %v889
      %v1018 = vunpack.c.l.b16 %v890
      %v1019 = vunpack.c.l.b16 %v891
      %v1020 = vunpack.c.l.b16 %v892
      %v1021 = vunpack.c.l.b16 %v893
      %v1022 = vunpack.c.l.b16 %v894
      %v1023 = vunpack.c.l.b16 %v895
      %v1024 = vunpack.c.l.b16 %v896
      %v1025 = vunpack.c.l.b16 %v897
      %v1026 = vpack.c.b16 %v1011, %v1010
      %v1027 = vpack.c.b16 %v1013, %v1012
      %v1028 = vpack.c.b16 %v1015, %v1014
      %v1029 = vpack.c.b16 %v1017, %v1016
      %v1030 = vpack.c.b16 %v1019, %v1018
      %v1031 = vpack.c.b16 %v1021, %v1020
      %v1032 = vpack.c.b16 %v1023, %v1022
      %v1033 = vpack.c.b16 %v1025, %v1024
      %1042 = vmatprep.subr.bf16.mxu0 0
      %1043 = vmatpush1.bf16.msra.mxu0 %v1026
      %1044 = vmatprep.subr.bf16.mxu0 0
      %1045 = vmatpush1.bf16.msra.mxu0 %v1027
      %1046 = vmatprep.subr.bf16.mxu0 0
      %1047 = vmatpush1.bf16.msra.mxu0 %v1028
      %1048 = vmatprep.subr.bf16.mxu0 0
      %1049 = vmatpush1.bf16.msra.mxu0 %v1029
      %1050 = vmatprep.subr.bf16.mxu0 0
      %1051 = vmatpush1.bf16.msra.mxu0 %v1030
      %1052 = vmatprep.subr.bf16.mxu0 0
      %1053 = vmatpush1.bf16.msra.mxu0 %v1031
      %1054 = vmatprep.subr.bf16.mxu0 0
      %1055 = vmatpush1.bf16.msra.mxu0 %v1032
      %1056 = vmatprep.subr.bf16.mxu0 0
      %1057 = vmatpush1.bf16.msra.mxu0 %v1033
      %1058 = vmatprep.subr.bf16.mxu0 0
      %1059 = vmatpush1.bf16.msra.mxu0 0
      %1060 = vmatprep.subr.bf16.mxu0 0
      %1061 = vmatpush1.bf16.msra.mxu0 0
      %1062 = vmatprep.subr.bf16.mxu0 0
      %1063 = vmatpush1.bf16.msra.mxu0 0
      %1064 = vmatprep.subr.bf16.mxu0 0
      %1065 = vmatpush1.bf16.msra.mxu0 0
      %1066 = vmatprep.subr.bf16.mxu0 0
      %1067 = vmatpush1.bf16.msra.mxu0 0
      %1068 = vmatprep.subr.bf16.mxu0 0
      %1069 = vmatpush1.bf16.msra.mxu0 0
      %1070 = vmatprep.subr.bf16.mxu0 0
      %1071 = vmatpush1.bf16.msra.mxu0 0
      %1072 = vmatprep.subr.bf16.mxu0 0
      %1073 = vmatpush1.bf16.msra.mxu0 0
      %1074 = vmatprep.mubr.bf16.mxu0 0
      %1075 = vmatmul.mubr.bf16.gmra.mrb[0].mxu0 %v962
      %v1076 = vpop.f32.mrb[0].mxu0
      %v1077 = vadd.f32 0.0, %v1076
      %v1078 = vpop.f32.mrb[0].mxu0
      %v1079 = vpop.f32.mrb[0].mxu0
      %v1080 = vadd.f32 0.0, %v1079
      %v1081 = vpop.f32.mrb[0].mxu0
      %1082 = vmatprep.mubr.bf16.mxu0 0
      %1083 = vmatmul.mubr.bf16.gmra.mrb[0].mxu0 %v963
      %v1084 = vpop.f32.mrb[0].mxu0
      %v1085 = vadd.f32 0.0, %v1084
      %v1086 = vpop.f32.mrb[0].mxu0
      %v1087 = vpop.f32.mrb[0].mxu0
      %v1088 = vadd.f32 0.0, %v1087
      %v1089 = vpop.f32.mrb[0].mxu0
      %1090 = vmatprep.mubr.bf16.mxu0 0
      %1091 = vmatmul.mubr.bf16.gmra.mrb[0].mxu0 %v964
      %v1092 = vpop.f32.mrb[0].mxu0
      %v1093 = vadd.f32 0.0, %v1092
      %v1094 = vpop.f32.mrb[0].mxu0
      %v1095 = vpop.f32.mrb[0].mxu0
      %v1096 = vadd.f32 0.0, %v1095
      %v1097 = vpop.f32.mrb[0].mxu0
      %1098 = vmatprep.mubr.bf16.mxu0 0
      %1099 = vmatmul.mubr.bf16.gmra.mrb[0].mxu0 %v965
      %v1100 = vpop.f32.mrb[0].mxu0
      %v1101 = vadd.f32 0.0, %v1100
      %v1102 = vpop.f32.mrb[0].mxu0
      %v1103 = vpop.f32.mrb[0].mxu0
      %v1104 = vadd.f32 0.0, %v1103
      %v1105 = vpop.f32.mrb[0].mxu0
      %1106 = vmatprep.mubr.bf16.mxu0 0
      %1107 = vmatmul.mubr.bf16.gmra.mrb[0].mxu0 %v966
      %v1108 = vpop.f32.mrb[0].mxu0
      %v1109 = vadd.f32 0.0, %v1108
      %v1110 = vpop.f32.mrb[0].mxu0
      %v1111 = vpop.f32.mrb[0].mxu0
      %v1112 = vadd.f32 0.0, %v1111
      %v1113 = vpop.f32.mrb[0].mxu0
      %1114 = vmatprep.mubr.bf16.mxu0 0
      %1115 = vmatmul.mubr.bf16.gmra.mrb[0].mxu0 %v967
      %v1116 = vpop.f32.mrb[0].mxu0
      %v1117 = vadd.f32 0.0, %v1116
      %v1118 = vpop.f32.mrb[0].mxu0
      %v1119 = vpop.f32.mrb[0].mxu0
      %v1120 = vadd.f32 0.0, %v1119
      %v1121 = vpop.f32.mrb[0].mxu0
      %1122 = vmatprep.mubr.bf16.mxu0 0
      %1123 = vmatmul.mubr.bf16.gmra.mrb[0].mxu0 %v968
      %v1124 = vpop.f32.mrb[0].mxu0
      %v1125 = vadd.f32 0.0, %v1124
      %v1126 = vpop.f32.mrb[0].mxu0
      %v1127 = vpop.f32.mrb[0].mxu0
      %v1128 = vadd.f32 0.0, %v1127
      %v1129 = vpop.f32.mrb[0].mxu0
      %1130 = vmatprep.mubr.bf16.mxu0 0
      %1131 = vmatmul.mubr.bf16.gmra.mrb[0].mxu0 %v969
      %v1132 = vpop.f32.mrb[0].mxu0
      %v1133 = vadd.f32 0.0, %v1132
      %v1134 = vpop.f32.mrb[0].mxu0
      %v1135 = vpop.f32.mrb[0].mxu0
      %v1136 = vadd.f32 0.0, %v1135
      %v1137 = vpop.f32.mrb[0].mxu0
      %1138 = vmatprep.mubr.bf16.mxu0 0
      %1139 = vmatmul.mubr.bf16.gmra.mrb[0].mxu0 %v970
      %v1140 = vpop.f32.mrb[0].mxu0
      %v1141 = vadd.f32 0.0, %v1140
      %v1142 = vpop.f32.mrb[0].mxu0
      %v1143 = vpop.f32.mrb[0].mxu0
      %v1144 = vadd.f32 0.0, %v1143
      %v1145 = vpop.f32.mrb[0].mxu0
      %1146 = vmatprep.mubr.bf16.mxu0 0
      %1147 = vmatmul.mubr.bf16.gmra.mrb[0].mxu0 %v971
      %v1148 = vpop.f32.mrb[0].mxu0
      %v1149 = vadd.f32 0.0, %v1148
      %v1150 = vpop.f32.mrb[0].mxu0
      %v1151 = vpop.f32.mrb[0].mxu0
      %v1152 = vadd.f32 0.0, %v1151
      %v1153 = vpop.f32.mrb[0].mxu0
      %1154 = vmatprep.mubr.bf16.mxu0 0
      %1155 = vmatmul.mubr.bf16.gmra.mrb[0].mxu0 %v972
      %v1156 = vpop.f32.mrb[0].mxu0
      %v1157 = vadd.f32 0.0, %v1156
      %v1158 = vpop.f32.mrb[0].mxu0
      %v1159 = vpop.f32.mrb[0].mxu0
      %v1160 = vadd.f32 0.0, %v1159
      %v1161 = vpop.f32.mrb[0].mxu0
      %1162 = vmatprep.mubr.bf16.mxu0 0
      %1163 = vmatmul.mubr.bf16.gmra.mrb[0].mxu0 %v973
      %v1164 = vpop.f32.mrb[0].mxu0
      %v1165 = vadd.f32 0.0, %v1164
      %v1166 = vpop.f32.mrb[0].mxu0
      %v1167 = vpop.f32.mrb[0].mxu0
      %v1168 = vadd.f32 0.0, %v1167
      %v1169 = vpop.f32.mrb[0].mxu0
      %1170 = vmatprep.mubr.bf16.mxu0 0
      %1171 = vmatmul.mubr.bf16.gmra.mrb[0].mxu0 %v974
      %v1172 = vpop.f32.mrb[0].mxu0
      %v1173 = vadd.f32 0.0, %v1172
      %v1174 = vpop.f32.mrb[0].mxu0
      %v1175 = vpop.f32.mrb[0].mxu0
      %v1176 = vadd.f32 0.0, %v1175
      %v1177 = vpop.f32.mrb[0].mxu0
      %1178 = vmatprep.mubr.bf16.mxu0 0
      %1179 = vmatmul.mubr.bf16.gmra.mrb[0].mxu0 %v975
      %v1180 = vpop.f32.mrb[0].mxu0
      %v1181 = vadd.f32 0.0, %v1180
      %v1182 = vpop.f32.mrb[0].mxu0
      %v1183 = vpop.f32.mrb[0].mxu0
      %v1184 = vadd.f32 0.0, %v1183
      %v1185 = vpop.f32.mrb[0].mxu0
      %1186 = vmatprep.mubr.bf16.mxu0 0
      %1187 = vmatmul.mubr.bf16.gmra.mrb[0].mxu0 %v976
      %v1188 = vpop.f32.mrb[0].mxu0
      %v1189 = vadd.f32 0.0, %v1188
      %v1190 = vpop.f32.mrb[0].mxu0
      %v1191 = vpop.f32.mrb[0].mxu0
      %v1192 = vadd.f32 0.0, %v1191
      %v1193 = vpop.f32.mrb[0].mxu0
      %1194 = vmatprep.mubr.bf16.mxu0 0
      %1195 = vmatmul.mubr.bf16.gmra.mrb[0].mxu0 %v977
      %v1196 = vpop.f32.mrb[0].mxu0
      %v1197 = vadd.f32 0.0, %v1196
      %v1198 = vpop.f32.mrb[0].mxu0
      %v1199 = vpop.f32.mrb[0].mxu0
      %v1200 = vadd.f32 0.0, %v1199
      %v1201 = vpop.f32.mrb[0].mxu0
      %1202 = vdwg.mxu0
      %v1203 = vadd.f32 %v724, %v1077
      %v1204 = vadd.f32 %v727, %v1080
      %v1205 = vadd.f32 %v732, %v1085
      %v1206 = vadd.f32 %v735, %v1088
      %v1207 = vadd.f32 %v740, %v1093
      %v1208 = vadd.f32 %v743, %v1096
      %v1209 = vadd.f32 %v748, %v1101
      %v1210 = vadd.f32 %v751, %v1104
      %v1211 = vadd.f32 %v756, %v1109
      %v1212 = vadd.f32 %v759, %v1112
      %v1213 = vadd.f32 %v764, %v1117
      %v1214 = vadd.f32 %v767, %v1120
      %v1215 = vadd.f32 %v772, %v1125
      %v1216 = vadd.f32 %v775, %v1128
      %v1217 = vadd.f32 %v780, %v1133
      %v1218 = vadd.f32 %v783, %v1136
      %v1219 = vadd.f32 %v788, %v1141
      %v1220 = vadd.f32 %v791, %v1144
      %v1221 = vadd.f32 %v796, %v1149
      %v1222 = vadd.f32 %v799, %v1152
      %v1223 = vadd.f32 %v804, %v1157
      %v1224 = vadd.f32 %v807, %v1160
      %v1225 = vadd.f32 %v812, %v1165
      %v1226 = vadd.f32 %v815, %v1168
      %v1227 = vadd.f32 %v820, %v1173
      %v1228 = vadd.f32 %v823, %v1176
      %v1229 = vadd.f32 %v828, %v1181
      %v1230 = vadd.f32 %v831, %v1184
      %v1231 = vadd.f32 %v836, %v1189
      %v1232 = vadd.f32 %v839, %v1192
      %v1233 = vadd.f32 %v844, %v1197
      %v1234 = vadd.f32 %v847, %v1200
      %v1235 = vmul.f32 %v1203, %v1203
      %v1236 = vmul.f32 %v1204, %v1204
      %v1237 = vmul.f32 %v1205, %v1205
      %v1238 = vmul.f32 %v1206, %v1206
      %v1239 = vmul.f32 %v1207, %v1207
      %v1240 = vmul.f32 %v1208, %v1208
      %v1241 = vmul.f32 %v1209, %v1209
      %v1242 = vmul.f32 %v1210, %v1210
      %v1243 = vmul.f32 %v1211, %v1211
      %v1244 = vmul.f32 %v1212, %v1212
      %v1245 = vmul.f32 %v1213, %v1213
      %v1246 = vmul.f32 %v1214, %v1214
      %v1247 = vmul.f32 %v1215, %v1215
      %v1248 = vmul.f32 %v1216, %v1216
      %v1249 = vmul.f32 %v1217, %v1217
      %v1250 = vmul.f32 %v1218, %v1218
      %v1251 = vmul.f32 %v1219, %v1219
      %v1252 = vmul.f32 %v1220, %v1220
      %v1253 = vmul.f32 %v1221, %v1221
      %v1254 = vmul.f32 %v1222, %v1222
      %v1255 = vmul.f32 %v1223, %v1223
      %v1256 = vmul.f32 %v1224, %v1224
      %v1257 = vmul.f32 %v1225, %v1225
      %v1258 = vmul.f32 %v1226, %v1226
      %v1259 = vmul.f32 %v1227, %v1227
      %v1260 = vmul.f32 %v1228, %v1228
      %v1261 = vmul.f32 %v1229, %v1229
      %v1262 = vmul.f32 %v1230, %v1230
      %v1263 = vmul.f32 %v1231, %v1231
      %v1264 = vmul.f32 %v1232, %v1232
      %v1265 = vmul.f32 %v1233, %v1233
      %v1266 = vmul.f32 %v1234, %v1234
      %1267 = vadd.xlane.f32.xlu0 %v1235
      %v1268 = vpop.xlane.xlu0 %1267
      %1269 = vadd.xlane.f32.xlu0 %v1236
      %v1270 = vpop.xlane.xlu0 %1269
      %1271 = vadd.xlane.f32.xlu0 %v1237
      %v1272 = vpop.xlane.xlu0 %1271
      %1273 = vadd.xlane.f32.xlu0 %v1238
      %v1274 = vpop.xlane.xlu0 %1273
      %1275 = vadd.xlane.f32.xlu0 %v1239
      %v1276 = vpop.xlane.xlu0 %1275
      %1277 = vadd.xlane.f32.xlu0 %v1240
      %v1278 = vpop.xlane.xlu0 %1277
      %1279 = vadd.xlane.f32.xlu0 %v1241
      %v1280 = vpop.xlane.xlu0 %1279
      %1281 = vadd.xlane.f32.xlu0 %v1242
      %v1282 = vpop.xlane.xlu0 %1281
      %1283 = vadd.xlane.f32.xlu0 %v1243
      %v1284 = vpop.xlane.xlu0 %1283
      %1285 = vadd.xlane.f32.xlu0 %v1244
      %v1286 = vpop.xlane.xlu0 %1285
      %1287 = vadd.xlane.f32.xlu0 %v1245
      %v1288 = vpop.xlane.xlu0 %1287
      %1289 = vadd.xlane.f32.xlu0 %v1246
      %v1290 = vpop.xlane.xlu0 %1289
      %1291 = vadd.xlane.f32.xlu0 %v1247
      %v1292 = vpop.xlane.xlu0 %1291
      %1293 = vadd.xlane.f32.xlu0 %v1248
      %v1294 = vpop.xlane.xlu0 %1293
      %1295 = vadd.xlane.f32.xlu0 %v1249
      %v1296 = vpop.xlane.xlu0 %1295
      %1297 = vadd.xlane.f32.xlu0 %v1250
      %v1298 = vpop.xlane.xlu0 %1297
      %1299 = vadd.xlane.f32.xlu0 %v1251
      %v1300 = vpop.xlane.xlu0 %1299
      %1301 = vadd.xlane.f32.xlu0 %v1252
      %v1302 = vpop.xlane.xlu0 %1301
      %1303 = vadd.xlane.f32.xlu0 %v1253
      %v1304 = vpop.xlane.xlu0 %1303
      %1305 = vadd.xlane.f32.xlu0 %v1254
      %v1306 = vpop.xlane.xlu0 %1305
      %1307 = vadd.xlane.f32.xlu0 %v1255
      %v1308 = vpop.xlane.xlu0 %1307
      %1309 = vadd.xlane.f32.xlu0 %v1256
      %v1310 = vpop.xlane.xlu0 %1309
      %1311 = vadd.xlane.f32.xlu0 %v1257
      %v1312 = vpop.xlane.xlu0 %1311
      %1313 = vadd.xlane.f32.xlu0 %v1258
      %v1314 = vpop.xlane.xlu0 %1313
      %1315 = vadd.xlane.f32.xlu0 %v1259
      %v1316 = vpop.xlane.xlu0 %1315
      %1317 = vadd.xlane.f32.xlu0 %v1260
      %v1318 = vpop.xlane.xlu0 %1317
      %1319 = vadd.xlane.f32.xlu0 %v1261
      %v1320 = vpop.xlane.xlu0 %1319
      %1321 = vadd.xlane.f32.xlu0 %v1262
      %v1322 = vpop.xlane.xlu0 %1321
      %1323 = vadd.xlane.f32.xlu0 %v1263
      %v1324 = vpop.xlane.xlu0 %1323
      %1325 = vadd.xlane.f32.xlu0 %v1264
      %v1326 = vpop.xlane.xlu0 %1325
      %1327 = vadd.xlane.f32.xlu0 %v1265
      %v1328 = vpop.xlane.xlu0 %1327
      %1329 = vadd.xlane.f32.xlu0 %v1266
      %v1330 = vpop.xlane.xlu0 %1329
      %v1331 = vmax.f32 %v1268, 1e-24
      %v1332 = vmax.f32 %v1270, 1e-24
      %v1333 = vmax.f32 %v1272, 1e-24
      %v1334 = vmax.f32 %v1274, 1e-24
      %v1335 = vmax.f32 %v1276, 1e-24
      %v1336 = vmax.f32 %v1278, 1e-24
      %v1337 = vmax.f32 %v1280, 1e-24
      %v1338 = vmax.f32 %v1282, 1e-24
      %v1339 = vmax.f32 %v1284, 1e-24
      %v1340 = vmax.f32 %v1286, 1e-24
      %v1341 = vmax.f32 %v1288, 1e-24
      %v1342 = vmax.f32 %v1290, 1e-24
      %v1343 = vmax.f32 %v1292, 1e-24
      %v1344 = vmax.f32 %v1294, 1e-24
      %v1345 = vmax.f32 %v1296, 1e-24
      %v1346 = vmax.f32 %v1298, 1e-24
      %v1347 = vmax.f32 %v1300, 1e-24
      %v1348 = vmax.f32 %v1302, 1e-24
      %v1349 = vmax.f32 %v1304, 1e-24
      %v1350 = vmax.f32 %v1306, 1e-24
      %v1351 = vmax.f32 %v1308, 1e-24
      %v1352 = vmax.f32 %v1310, 1e-24
      %v1353 = vmax.f32 %v1312, 1e-24
      %v1354 = vmax.f32 %v1314, 1e-24
      %v1355 = vmax.f32 %v1316, 1e-24
      %v1356 = vmax.f32 %v1318, 1e-24
      %v1357 = vmax.f32 %v1320, 1e-24
      %v1358 = vmax.f32 %v1322, 1e-24
      %v1359 = vmax.f32 %v1324, 1e-24
      %v1360 = vmax.f32 %v1326, 1e-24
      %v1361 = vmax.f32 %v1328, 1e-24
      %v1362 = vmax.f32 %v1330, 1e-24
      %v1363 = vrsqrt.pop %v1331
      %v1364 = vrsqrt.pop %v1332
      %v1365 = vrsqrt.pop %v1333
      %v1366 = vrsqrt.pop %v1334
      %v1367 = vrsqrt.pop %v1335
      %v1368 = vrsqrt.pop %v1336
      %v1369 = vrsqrt.pop %v1337
      %v1370 = vrsqrt.pop %v1338
      %v1371 = vrsqrt.pop %v1339
      %v1372 = vrsqrt.pop %v1340
      %v1373 = vrsqrt.pop %v1341
      %v1374 = vrsqrt.pop %v1342
      %v1375 = vrsqrt.pop %v1343
      %v1376 = vrsqrt.pop %v1344
      %v1377 = vrsqrt.pop %v1345
      %v1378 = vrsqrt.pop %v1346
      %v1379 = vrsqrt.pop %v1347
      %v1380 = vrsqrt.pop %v1348
      %v1381 = vrsqrt.pop %v1349
      %v1382 = vrsqrt.pop %v1350
      %v1383 = vrsqrt.pop %v1351
      %v1384 = vrsqrt.pop %v1352
      %v1385 = vrsqrt.pop %v1353
      %v1386 = vrsqrt.pop %v1354
      %v1387 = vrsqrt.pop %v1355
      %v1388 = vrsqrt.pop %v1356
      %v1389 = vrsqrt.pop %v1357
      %v1390 = vrsqrt.pop %v1358
      %v1391 = vrsqrt.pop %v1359
      %v1392 = vrsqrt.pop %v1360
      %v1393 = vrsqrt.pop %v1361
      %v1394 = vrsqrt.pop %v1362
      %v1395 = vmul.f32 %v1203, %v1363
      %v1396 = vmul.f32 %v1204, %v1364
      %v1397 = vmul.f32 %v1205, %v1365
      %v1398 = vmul.f32 %v1206, %v1366
      %v1399 = vmul.f32 %v1207, %v1367
      %v1400 = vmul.f32 %v1208, %v1368
      %v1401 = vmul.f32 %v1209, %v1369
      %v1402 = vmul.f32 %v1210, %v1370
      %v1403 = vmul.f32 %v1211, %v1371
      %v1404 = vmul.f32 %v1212, %v1372
      %v1405 = vmul.f32 %v1213, %v1373
      %v1406 = vmul.f32 %v1214, %v1374
      %v1407 = vmul.f32 %v1215, %v1375
      %v1408 = vmul.f32 %v1216, %v1376
      %v1409 = vmul.f32 %v1217, %v1377
      %v1410 = vmul.f32 %v1218, %v1378
      %v1411 = vmul.f32 %v1219, %v1379
      %v1412 = vmul.f32 %v1220, %v1380
      %v1413 = vmul.f32 %v1221, %v1381
      %v1414 = vmul.f32 %v1222, %v1382
      %v1415 = vmul.f32 %v1223, %v1383
      %v1416 = vmul.f32 %v1224, %v1384
      %v1417 = vmul.f32 %v1225, %v1385
      %v1418 = vmul.f32 %v1226, %v1386
      %v1419 = vmul.f32 %v1227, %v1387
      %v1420 = vmul.f32 %v1228, %v1388
      %v1421 = vmul.f32 %v1229, %v1389
      %v1422 = vmul.f32 %v1230, %v1390
      %v1423 = vmul.f32 %v1231, %v1391
      %v1424 = vmul.f32 %v1232, %v1392
      %v1425 = vmul.f32 %v1233, %v1393
      %v1426 = vmul.f32 %v1234, %v1394
      %v1427 = vmax.f32 %v1395, 0.0
      %v1428 = vmax.f32 %v1396, 0.0
      %v1429 = vmax.f32 %v1397, 0.0
      %v1430 = vmax.f32 %v1398, 0.0
      %v1431 = vmax.f32 %v1399, 0.0
      %v1432 = vmax.f32 %v1400, 0.0
      %v1433 = vmax.f32 %v1401, 0.0
      %v1434 = vmax.f32 %v1402, 0.0
      %v1435 = vmax.f32 %v1403, 0.0
      %v1436 = vmax.f32 %v1404, 0.0
      %v1437 = vmax.f32 %v1405, 0.0
      %v1438 = vmax.f32 %v1406, 0.0
      %v1439 = vmax.f32 %v1407, 0.0
      %v1440 = vmax.f32 %v1408, 0.0
      %v1441 = vmax.f32 %v1409, 0.0
      %v1442 = vmax.f32 %v1410, 0.0
      %v1443 = vmax.f32 %v1411, 0.0
      %v1444 = vmax.f32 %v1412, 0.0
      %v1445 = vmax.f32 %v1413, 0.0
      %v1446 = vmax.f32 %v1414, 0.0
      %v1447 = vmax.f32 %v1415, 0.0
      %v1448 = vmax.f32 %v1416, 0.0
      %v1449 = vmax.f32 %v1417, 0.0
      %v1450 = vmax.f32 %v1418, 0.0
      %v1451 = vmax.f32 %v1419, 0.0
      %v1452 = vmax.f32 %v1420, 0.0
      %v1453 = vmax.f32 %v1421, 0.0
      %v1454 = vmax.f32 %v1422, 0.0
      %v1455 = vmax.f32 %v1423, 0.0
      %v1456 = vmax.f32 %v1424, 0.0
      %v1457 = vmax.f32 %v1425, 0.0
      %v1458 = vmax.f32 %v1426, 0.0
      %v1459 = vpack.c.bf16 %v1428, %v1427
      %v1460 = vpack.c.bf16 %v1430, %v1429
      %v1461 = vpack.c.bf16 %v1432, %v1431
      %v1462 = vpack.c.bf16 %v1434, %v1433
      %v1463 = vpack.c.bf16 %v1436, %v1435
      %v1464 = vpack.c.bf16 %v1438, %v1437
      %v1465 = vpack.c.bf16 %v1440, %v1439
      %v1466 = vpack.c.bf16 %v1442, %v1441
      %v1467 = vpack.c.bf16 %v1444, %v1443
      %v1468 = vpack.c.bf16 %v1446, %v1445
      %v1469 = vpack.c.bf16 %v1448, %v1447
      %v1470 = vpack.c.bf16 %v1450, %v1449
      %v1471 = vpack.c.bf16 %v1452, %v1451
      %v1472 = vpack.c.bf16 %v1454, %v1453
      %v1473 = vpack.c.bf16 %v1456, %v1455
      %v1474 = vpack.c.bf16 %v1458, %v1457
      %v1491 = vunpack.c.l.b16 %v1459
      %v1492 = vunpack.c.h.b16 %v1459
      %v1493 = vunpack.c.l.b16 %v1460
      %v1494 = vunpack.c.h.b16 %v1460
      %v1495 = vunpack.c.l.b16 %v1461
      %v1496 = vunpack.c.h.b16 %v1461
      %v1497 = vunpack.c.l.b16 %v1462
      %v1498 = vunpack.c.h.b16 %v1462
      %v1499 = vunpack.c.l.b16 %v1463
      %v1500 = vunpack.c.h.b16 %v1463
      %v1501 = vunpack.c.l.b16 %v1464
      %v1502 = vunpack.c.h.b16 %v1464
      %v1503 = vunpack.c.l.b16 %v1465
      %v1504 = vunpack.c.h.b16 %v1465
      %v1505 = vunpack.c.l.b16 %v1466
      %v1506 = vunpack.c.h.b16 %v1466
      %v1507 = vunpack.c.l.b16 %v1467
      %v1508 = vunpack.c.h.b16 %v1467
      %v1509 = vunpack.c.l.b16 %v1468
      %v1510 = vunpack.c.h.b16 %v1468
      %v1511 = vunpack.c.l.b16 %v1469
      %v1512 = vunpack.c.h.b16 %v1469
      %v1513 = vunpack.c.l.b16 %v1470
      %v1514 = vunpack.c.h.b16 %v1470
      %v1515 = vunpack.c.l.b16 %v1471
      %v1516 = vunpack.c.h.b16 %v1471
      %v1517 = vunpack.c.l.b16 %v1472
      %v1518 = vunpack.c.h.b16 %v1472
      %v1519 = vunpack.c.l.b16 %v1473
      %v1520 = vunpack.c.h.b16 %v1473
      %v1521 = vunpack.c.l.b16 %v1474
      %v1522 = vunpack.c.h.b16 %v1474
      %v1523 = vpack.c.b16 %v1491, %v1491
      %v1524 = vpack.c.b16 %v1492, %v1492
      %v1525 = vpack.c.b16 %v1493, %v1493
      %v1526 = vpack.c.b16 %v1494, %v1494
      %v1527 = vpack.c.b16 %v1495, %v1495
      %v1528 = vpack.c.b16 %v1496, %v1496
      %v1529 = vpack.c.b16 %v1497, %v1497
      %v1530 = vpack.c.b16 %v1498, %v1498
      %v1531 = vpack.c.b16 %v1499, %v1499
      %v1532 = vpack.c.b16 %v1500, %v1500
      %v1533 = vpack.c.b16 %v1501, %v1501
      %v1534 = vpack.c.b16 %v1502, %v1502
      %v1535 = vpack.c.b16 %v1503, %v1503
      %v1536 = vpack.c.b16 %v1504, %v1504
      %v1537 = vpack.c.b16 %v1505, %v1505
      %v1538 = vpack.c.b16 %v1506, %v1506
      %v1539 = vpack.c.b16 %v1507, %v1507
      %v1540 = vpack.c.b16 %v1508, %v1508
      %v1541 = vpack.c.b16 %v1509, %v1509
      %v1542 = vpack.c.b16 %v1510, %v1510
      %v1543 = vpack.c.b16 %v1511, %v1511
      %v1544 = vpack.c.b16 %v1512, %v1512
      %v1545 = vpack.c.b16 %v1513, %v1513
      %v1546 = vpack.c.b16 %v1514, %v1514
      %v1547 = vpack.c.b16 %v1515, %v1515
      %v1548 = vpack.c.b16 %v1516, %v1516
      %v1549 = vpack.c.b16 %v1517, %v1517
      %v1550 = vpack.c.b16 %v1518, %v1518
      %v1551 = vpack.c.b16 %v1519, %v1519
      %v1552 = vpack.c.b16 %v1520, %v1520
      %v1553 = vpack.c.b16 %v1521, %v1521
      %v1554 = vpack.c.b16 %v1522, %v1522
      %1587 = vst [vmem:[#allocation12] sm:$0xf] %v1523
      %1588 = vst [vmem:[#allocation12 + $0x4] sm:$0xf] %v1524
      %1589 = vst [vmem:[#allocation12 + $0x8] sm:$0xf] %v1525
      %1590 = vst [vmem:[#allocation12 + $0xc] sm:$0xf] %v1526
      %1591 = vst [vmem:[#allocation12 + $0x10] sm:$0xf] %v1527
      %1592 = vst [vmem:[#allocation12 + $0x14] sm:$0xf] %v1528
      %1593 = vst [vmem:[#allocation12 + $0x18] sm:$0xf] %v1529
      %1594 = vst [vmem:[#allocation12 + $0x1c] sm:$0xf] %v1530
      %1595 = vst [vmem:[#allocation12 + $0x20] sm:$0xf] %v1531
      %1596 = vst [vmem:[#allocation12 + $0x24] sm:$0xf] %v1532
      %1597 = vst [vmem:[#allocation12 + $0x28] sm:$0xf] %v1533
      %1598 = vst [vmem:[#allocation12 + $0x2c] sm:$0xf] %v1534
      %1599 = vst [vmem:[#allocation12 + $0x30] sm:$0xf] %v1535
      %1600 = vst [vmem:[#allocation12 + $0x34] sm:$0xf] %v1536
      %1601 = vst [vmem:[#allocation12 + $0x38] sm:$0xf] %v1537
      %1602 = vst [vmem:[#allocation12 + $0x3c] sm:$0xf] %v1538
      %1603 = vst [vmem:[#allocation12 + $0x40] sm:$0xf] %v1539
      %1604 = vst [vmem:[#allocation12 + $0x44] sm:$0xf] %v1540
      %1605 = vst [vmem:[#allocation12 + $0x48] sm:$0xf] %v1541
      %1606 = vst [vmem:[#allocation12 + $0x4c] sm:$0xf] %v1542
      %1607 = vst [vmem:[#allocation12 + $0x50] sm:$0xf] %v1543
      %1608 = vst [vmem:[#allocation12 + $0x54] sm:$0xf] %v1544
      %1609 = vst [vmem:[#allocation12 + $0x58] sm:$0xf] %v1545
      %1610 = vst [vmem:[#allocation12 + $0x5c] sm:$0xf] %v1546
      %1611 = vst [vmem:[#allocation12 + $0x60] sm:$0xf] %v1547
      %1612 = vst [vmem:[#allocation12 + $0x64] sm:$0xf] %v1548
      %1613 = vst [vmem:[#allocation12 + $0x68] sm:$0xf] %v1549
      %1614 = vst [vmem:[#allocation12 + $0x6c] sm:$0xf] %v1550
      %1615 = vst [vmem:[#allocation12 + $0x70] sm:$0xf] %v1551
      %1616 = vst [vmem:[#allocation12 + $0x74] sm:$0xf] %v1552
      %1617 = vst [vmem:[#allocation12 + $0x78] sm:$0xf] %v1553
      %1618 = vst [vmem:[#allocation12 + $0x7c] sm:$0xf] %v1554
    $region53: #{tpu_custom_call.1} parent=1 // pred_fallthru
      _
    // Predicated region
    $region54: #{tpu_custom_call.1} parent=1 // pred_check
      _
    $region55: #{tpu_custom_call.1} parent=1 // pred_check_branch
      %1620 = sbr.rel (0) target = $region57
    $region56: #{tpu_custom_call.1} parent=1 // pred_region
      %s1622 = ssub.s32 2048, 2048
      %1623 = vsyncadd [#allocation5], %s1622
      %s1624 = sshll.u32 [#allocation12], 4
      %s1625 = int_to_ptr.vmem [resolvable:$true] %s1624
      %1630 = dma.vmem_to_hbm [thread:$0]  %s1625, 2048, %s6, [#allocation5], 64, 64, 4
    $region57: #{tpu_custom_call.1} parent=1 // pred_fallthru
      _
    // Predicated region
    $region58: #{tpu_custom_call.1} parent=1 // pred_check
      _
    $region59: #{tpu_custom_call.1} parent=1 // pred_check_branch
      %1632 = sbr.rel (0) target = $region61
    $region60: #{tpu_custom_call.1} parent=1 // pred_region
      %1633 = dma.done [#allocation5], 2048
    $region61: #{tpu_custom_call.1} parent=1 // pred_fallthru
      _
    %1634 = vsyncpa [#allocation4], 1
    %1635 = vsyncpa [#allocation7], 1
    %1636 = vsyncpa [#allocation10], 1
    %1637 = vsyncpa [#allocation5], 1

</llo_original>
